<compile_context>
chip_gen: v7x
topology: tpu7x:2x2x1
jax: 0.10.0
libtpu: 0.0.40
codegen_flags: <defaults>
</compile_context>

<pallas_src>
import functools

import jax
import jax.numpy as jnp
from jax import lax
from jax.experimental import pallas as pl
from jax.experimental.pallas import tpu as pltpu


def _round_up(x, m):
    return (x + m - 1) // m * m


def _lstm_recurrence_kernel(gx_ref, whh_ref, hs_ref, hn_ref, cn_ref,
                            h_scr, c_scr, *, unroll):
    """One grid step == T_CHUNK timesteps of the LSTM recurrence for one batch block.

    gx_ref : (T_CHUNK, Bb, 4*Hp)  precomputed x @ W_ih^T + bias   (time-major)
    whh_ref: (Hp, 4*Hp)           recurrent weight (resident across the grid)
    hs_ref : (T_CHUNK, Bb, Hp)    per-timestep hidden states (time-major)
    hn_ref / cn_ref : (Bb, Hp)    final h / c (resident, written on last chunk)
    h_scr / c_scr   : (Bb, Hp)    f32 carried state across time chunks
    """
    tc = pl.program_id(1)
    Hp = cn_ref.shape[-1]
    t_chunk = gx_ref.shape[0]

    @pl.when(tc == 0)
    def _():
        h_scr[...] = jnp.zeros_like(h_scr)
        c_scr[...] = jnp.zeros_like(c_scr)

    # Hoist the (resident) recurrent weight read out of the inner time loop.
    whh = whh_ref[...]

    def step(k, carry):
        h_prev, c_prev = carry  # f32 (Bb, Hp)
        # gates layout follows PyTorch: [i | f | g | o], each of (padded) width
        # Hp, so every slice below is lane-aligned (Hp % 128 == 0).
        gates = (gx_ref[k].astype(jnp.float32)
                 + jnp.dot(h_prev.astype(whh.dtype), whh,
                           preferred_element_type=jnp.float32))
        i_g = jax.nn.sigmoid(gates[:, 0 * Hp:1 * Hp])
        f_g = jax.nn.sigmoid(gates[:, 1 * Hp:2 * Hp])
        g_g = jnp.tanh(gates[:, 2 * Hp:3 * Hp])
        o_g = jax.nn.sigmoid(gates[:, 3 * Hp:4 * Hp])
        c_new = f_g * c_prev + i_g * g_g
        h_new = o_g * jnp.tanh(c_new)
        hs_ref[k] = h_new.astype(hs_ref.dtype)
        return h_new, c_new

    h_fin, c_fin = lax.fori_loop(0, t_chunk, step,
                                 (h_scr[...], c_scr[...]), unroll=unroll)
    h_scr[...] = h_fin
    c_scr[...] = c_fin

    @pl.when(tc == pl.num_programs(1) - 1)
    def _():
        hn_ref[...] = h_fin.astype(hn_ref.dtype)
        cn_ref[...] = c_fin.astype(cn_ref.dtype)


def rnn_forward(x, params, *, compute_dtype=jnp.float32, t_chunk=None,
                batch_block=None):
    """Forward pass of the PyTorch RNN module (LSTM + per-timestep Linear).

    x: (B, T, input_size) float32 (batch_first, same as the PyTorch module).
    Returns (output (B, T, O) f32, (h_n (1, B, H) f32, c_n (1, B, H) f32)).
    """
    B, T, D = x.shape
    H = params["w_hh_l0"].shape[1]
    O = params["w_dec"].shape[0]

    # ---- alignment: pad batch to the 8-sublane tile and the per-gate width to
    # a multiple of 128 lanes.  Padded weight rows/cols and biases are zero, so
    # the padded h/c lanes stay exactly 0 and real lanes are unchanged.
    Bp = _round_up(B, 8)
    Hp = _round_up(H, 128)

    def pad_gate_rows(w):          # (4H, K) -> (4Hp, K), per-gate zero padding
        w4 = w.reshape(4, H, -1)
        w4 = jnp.pad(w4, ((0, 0), (0, Hp - H), (0, 0)))
        return w4.reshape(4 * Hp, -1)

    w_ih_t = pad_gate_rows(params["w_ih_l0"]).T                      # (D, 4Hp)
    w_hh_p = pad_gate_rows(params["w_hh_l0"])                        # (4Hp, H)
    w_hh_t = jnp.pad(w_hh_p, ((0, 0), (0, Hp - H))).T                # (Hp, 4Hp)
    bias = pad_gate_rows(
        (params["b_ih_l0"] + params["b_hh_l0"])[:, None])[:, 0]      # (4Hp,)
    w_dec_t = jnp.pad(params["w_dec"], ((0, 0), (0, Hp - H))).T      # (Hp, O)
    b_dec = params["b_dec"]                                          # (O,)

    w_ih_t = w_ih_t.astype(compute_dtype)
    w_hh_t = w_hh_t.astype(compute_dtype)
    w_dec_t = w_dec_t.astype(compute_dtype)

    x_p = jnp.pad(x, ((0, Bp - B), (0, 0), (0, 0))).astype(compute_dtype)

    # ---- (1) non-recurrent input projection for ALL timesteps in one big
    # matmul (off the serial critical path), produced directly in time-major
    # layout (no separate HBM transpose of x).
    gx = (jnp.einsum("btd,dg->tbg", x_p, w_ih_t,
                     preferred_element_type=jnp.float32)
          + bias).astype(compute_dtype)                              # (T, Bp, 4Hp)

    # ---- (2) recurrent Pallas kernel over (batch blocks, time chunks).
    if t_chunk is None:
        t_chunk = next((c for c in (32, 16, 8, 4, 2, 1) if T % c == 0), 1)
    assert T % t_chunk == 0
    if batch_block is None:
        batch_block = Bp   # set Bp // 2 on v7x (2 TensorCores) for large B
    assert Bp % batch_block == 0 and batch_block % 8 == 0
    nb, nt = Bp // batch_block, T // t_chunk
    unroll = t_chunk <= 32   # short fixed inner loop -> fully unroll for LLO

    grid_spec = pltpu.PrefetchScalarGridSpec(
        num_scalar_prefetch=0,
        grid=(nb, nt),
        in_specs=[
            pl.BlockSpec((t_chunk, batch_block, 4 * Hp),
                         lambda bb, tc: (tc, bb, 0)),                # gate slab
            # Resident recurrent weight (constant index map).  For very large H
            # on v7x (64 MiB VMEM) keep it bf16, single-buffer it via
            # pipeline_mode=pl.Buffered(1) and raise vmem_limit_bytes.
            pl.BlockSpec((Hp, 4 * Hp), lambda bb, tc: (0, 0)),
        ],
        out_specs=[
            pl.BlockSpec((t_chunk, batch_block, Hp),
                         lambda bb, tc: (tc, bb, 0)),                # hidden states
            pl.BlockSpec((batch_block, Hp), lambda bb, tc: (bb, 0)),  # h_n
            pl.BlockSpec((batch_block, Hp), lambda bb, tc: (bb, 0)),  # c_n
        ],
        scratch_shapes=[
            pltpu.VMEM((batch_block, Hp), jnp.float32),  # carried h (f32)
            pltpu.VMEM((batch_block, Hp), jnp.float32),  # carried c (f32)
        ],
    )

    hs, h_n, c_n = pl.pallas_call(
        functools.partial(_lstm_recurrence_kernel, unroll=unroll),
        out_shape=(
            jax.ShapeDtypeStruct((T, Bp, Hp), compute_dtype),  # hidden states
            jax.ShapeDtypeStruct((Bp, Hp), jnp.float32),       # h_n
            jax.ShapeDtypeStruct((Bp, Hp), jnp.float32),       # c_n
        ),
        grid_spec=grid_spec,
        compiler_params=pltpu.CompilerParams(
            # batch blocks are independent (megacore-shardable on v7x); the
            # time axis carries the recurrence and must stay sequential.
            dimension_semantics=("parallel", "arbitrary")),
    )(gx, w_hh_t)

    # ---- (3) decoder over all timesteps as one big, lane-dense matmul,
    # emitted directly in batch_first layout (no output transpose).
    y = (jnp.einsum("tbh,ho->bto", hs, w_dec_t,
                    preferred_element_type=jnp.float32)
         + b_dec)                                                    # (Bp, T, O)

    output = y[:B]
    h_n = h_n[:B, :H][None]                                          # (1, B, H)
    c_n = c_n[:B, :H][None]                                          # (1, B, H)
    return output, (h_n, c_n)


def _reference_forward(x, params):
    """Pure-JAX reference (mirrors PyTorch LSTM + Linear) for validation."""
    B, T, D = x.shape
    H = params["w_hh_l0"].shape[1]
    w_ih_t = params["w_ih_l0"].T
    w_hh_t = params["w_hh_l0"].T
    bias = params["b_ih_l0"] + params["b_hh_l0"]

    def step(carry, x_t):
        h, c = carry
        gates = x_t @ w_ih_t + h @ w_hh_t + bias
        i = jax.nn.sigmoid(gates[:, 0 * H:1 * H])
        f = jax.nn.sigmoid(gates[:, 1 * H:2 * H])
        g = jnp.tanh(gates[:, 2 * H:3 * H])
        o = jax.nn.sigmoid(gates[:, 3 * H:4 * H])
        c = f * c + i * g
        h = o * jnp.tanh(c)
        return (h, c), h

    h0 = jnp.zeros((B, H), jnp.float32)
    c0 = jnp.zeros((B, H), jnp.float32)
    (h_n, c_n), hs = lax.scan(step, (h0, c0), jnp.transpose(x, (1, 0, 2)))
    hs = jnp.transpose(hs, (1, 0, 2))                    # (B, T, H)
    out = hs @ params["w_dec"].T + params["b_dec"]
    return out, (h_n[None], c_n[None])


def init_params(key, input_size, hidden_size, output_size):
    H = hidden_size
    k = 1.0 / jnp.sqrt(H)
    keys = jax.random.split(key, 6)
    u = lambda kk, shape: jax.random.uniform(kk, shape, jnp.float32, -k, k)
    return {
        "w_ih_l0": u(keys[0], (4 * H, input_size)),
        "w_hh_l0": u(keys[1], (4 * H, H)),
        "b_ih_l0": u(keys[2], (4 * H,)),
        "b_hh_l0": u(keys[3], (4 * H,)),
        "w_dec": u(keys[4], (output_size, H)),
        "b_dec": u(keys[5], (output_size,)),
    }


if __name__ == "__main__":
    B, T, INPUT, HIDDEN, OUTPUT = 2, 8, 16, 32, 8

    key = jax.random.PRNGKey(0)
    pkey, xkey = jax.random.split(key)
    params = init_params(pkey, INPUT, HIDDEN, OUTPUT)
    x = jax.random.normal(xkey, (B, T, INPUT), jnp.float32)

    ref_out, (ref_h, ref_c) = _reference_forward(x, params)

    # f32 path: tight numerical check against the pure-JAX / PyTorch semantics.
    fwd_f32 = jax.jit(functools.partial(rnn_forward, params=params,
                                        compute_dtype=jnp.float32))
    out, (h_n, c_n) = fwd_f32(x)
    jax.block_until_ready(out)
    jax.block_until_ready(h_n)
    jax.block_until_ready(c_n)
    assert out.shape == (B, T, OUTPUT)
    assert h_n.shape == (1, B, HIDDEN) and c_n.shape == (1, B, HIDDEN)
    assert jnp.allclose(out, ref_out, atol=1e-4, rtol=1e-4)
    assert jnp.allclose(h_n, ref_h, atol=1e-4, rtol=1e-4)
    assert jnp.allclose(c_n, ref_c, atol=1e-4, rtol=1e-4)

    # bf16 weights/activations (MXU-native) with f32 accumulation & f32 state.
    fwd_bf16 = jax.jit(functools.partial(rnn_forward, params=params,
                                         compute_dtype=jnp.bfloat16))
    out_b, (h_b, c_b) = fwd_bf16(x)
    jax.block_until_ready(out_b)
    assert jnp.allclose(out_b, ref_out, atol=5e-2, rtol=5e-2)
    assert jnp.allclose(h_b, ref_h, atol=5e-2, rtol=5e-2)
    assert jnp.allclose(c_b, ref_c, atol=5e-2, rtol=5e-2)

    print("KERNEL_OK")
</pallas_src>

<mosaic_0001>
module attributes {stable_mosaic.version = 11 : i64} {
  func.func @_lstm_recurrence_kernel(%arg0: i32, %arg1: i32, %arg2: memref<8x8x512xf32, #tpu.memory_space<vmem>>, %arg3: memref<128x512xf32, #tpu.memory_space<vmem>>, %arg4: memref<8x8x128xf32, #tpu.memory_space<vmem>>, %arg5: memref<8x128xf32, #tpu.memory_space<vmem>>, %arg6: memref<8x128xf32, #tpu.memory_space<vmem>>, %arg7: memref<8x128xf32, #tpu.memory_space<vmem>>, %arg8: memref<8x128xf32, #tpu.memory_space<vmem>>) attributes {dimension_semantics = [#tpu.dimension_semantics<parallel>, #tpu.dimension_semantics<arbitrary>], iteration_bounds = array<i64: 1, 1>, scalar_prefetch = 0 : i64, scratch_operands = 2 : i64, tpu.core_type = #tpu.core_type<tc>, window_params = [{transform_indices = @transform_0, window_bounds = array<i64: 8, 8, 512>}, {pipeline_mode = #tpu.pipeline_mode<synchronous>, transform_indices = @transform_1, window_bounds = array<i64: 128, 512>}, {transform_indices = @transform_2, window_bounds = array<i64: 8, 8, 128>}, {transform_indices = @transform_3, window_bounds = array<i64: 8, 128>}, {transform_indices = @transform_4, window_bounds = array<i64: 8, 128>}]} {
    %c0_i32 = arith.constant 0 : i32
    %0 = arith.cmpi eq, %arg1, %c0_i32 : i32
    %1 = arith.extui %0 : i1 to i32
    %c0_i32_0 = arith.constant 0 : i32
    %2 = arith.cmpi ne, %1, %c0_i32_0 : i32
    scf.if %2 {
      %cst_76 = arith.constant 0.000000e+00 : f32
      %283 = vector.broadcast %cst_76 : f32 to vector<8x128xf32>
      %c0_77 = arith.constant 0 : index
      %c0_78 = arith.constant 0 : index
      %284 = vector.load %arg7[%c0_77, %c0_78] : memref<8x128xf32, #tpu.memory_space<vmem>>, vector<8x128xf32>
      tpu.vector_store %arg7[%c0_77, %c0_78], %283 {strides = array<i32>} : memref<8x128xf32, #tpu.memory_space<vmem>>, vector<8x128xf32>,
      %cst_79 = arith.constant 0.000000e+00 : f32
      %285 = vector.broadcast %cst_79 : f32 to vector<8x128xf32>
      %c0_80 = arith.constant 0 : index
      %c0_81 = arith.constant 0 : index
      %286 = vector.load %arg8[%c0_80, %c0_81] : memref<8x128xf32, #tpu.memory_space<vmem>>, vector<8x128xf32>
      tpu.vector_store %arg8[%c0_80, %c0_81], %285 {strides = array<i32>} : memref<8x128xf32, #tpu.memory_space<vmem>>, vector<8x128xf32>,
    } else {
    }
    %c0 = arith.constant 0 : index
    %c0_1 = arith.constant 0 : index
    %3 = vector.load %arg3[%c0, %c0_1] : memref<128x512xf32, #tpu.memory_space<vmem>>, vector<128x512xf32>
    %c0_2 = arith.constant 0 : index
    %c0_3 = arith.constant 0 : index
    %4 = vector.load %arg7[%c0_2, %c0_3] : memref<8x128xf32, #tpu.memory_space<vmem>>, vector<8x128xf32>
    %c0_4 = arith.constant 0 : index
    %c0_5 = arith.constant 0 : index
    %5 = vector.load %arg8[%c0_4, %c0_5] : memref<8x128xf32, #tpu.memory_space<vmem>>, vector<8x128xf32>
    %c0_i32_6 = arith.constant 0 : i32
    %6 = arith.index_cast %c0_i32_6 : i32 to index
    %c0_7 = arith.constant 0 : index
    %c0_8 = arith.constant 0 : index
    %7 = vector.load %arg2[%6, %c0_7, %c0_8] : memref<8x8x512xf32, #tpu.memory_space<vmem>>, vector<1x8x512xf32>
    %8 = vector.shape_cast %7 : vector<1x8x512xf32> to vector<8x512xf32>
    %cst = arith.constant dense<0.000000e+00> : vector<8x512xf32>
    %9 = tpu.matmul %4, %3, %cst {dimension_numbers = #tpu.dot_dimension_numbers<[1], [0], [0], [1], [0, 0, 1, 1], [], []>} : vector<8x128xf32>, vector<128x512xf32>, vector<8x512xf32> -> vector<8x512xf32>
    %10 = arith.addf %8, %9 : vector<8x512xf32>
    %11 = vector.extract_strided_slice %10 {offsets = [0, 0], sizes = [8, 128], strides = [1, 1]} : vector<8x512xf32> to vector<8x128xf32>
    %12 = arith.negf %11 : vector<8x128xf32>
    %13 = math.exp %12 : vector<8x128xf32>
    %cst_9 = arith.constant 1.000000e+00 : f32
    %14 = vector.broadcast %cst_9 : f32 to vector<8x128xf32>
    %15 = arith.addf %14, %13 : vector<8x128xf32>
    %16 = arith.divf %14, %15 : vector<8x128xf32>
    %17 = vector.extract_strided_slice %10 {offsets = [0, 128], sizes = [8, 128], strides = [1, 1]} : vector<8x512xf32> to vector<8x128xf32>
    %18 = arith.negf %17 : vector<8x128xf32>
    %19 = math.exp %18 : vector<8x128xf32>
    %cst_10 = arith.constant 1.000000e+00 : f32
    %20 = vector.broadcast %cst_10 : f32 to vector<8x128xf32>
    %21 = arith.addf %20, %19 : vector<8x128xf32>
    %22 = arith.divf %20, %21 : vector<8x128xf32>
    %23 = vector.extract_strided_slice %10 {offsets = [0, 256], sizes = [8, 128], strides = [1, 1]} : vector<8x512xf32> to vector<8x128xf32>
    %24 = math.tanh %23 : vector<8x128xf32>
    %25 = vector.extract_strided_slice %10 {offsets = [0, 384], sizes = [8, 128], strides = [1, 1]} : vector<8x512xf32> to vector<8x128xf32>
    %26 = arith.negf %25 : vector<8x128xf32>
    %27 = math.exp %26 : vector<8x128xf32>
    %cst_11 = arith.constant 1.000000e+00 : f32
    %28 = vector.broadcast %cst_11 : f32 to vector<8x128xf32>
    %29 = arith.addf %28, %27 : vector<8x128xf32>
    %30 = arith.divf %28, %29 : vector<8x128xf32>
    %31 = arith.mulf %22, %5 : vector<8x128xf32>
    %32 = arith.mulf %16, %24 : vector<8x128xf32>
    %33 = arith.addf %31, %32 : vector<8x128xf32>
    %34 = math.tanh %33 : vector<8x128xf32>
    %35 = arith.mulf %30, %34 : vector<8x128xf32>
    %36 = arith.index_cast %c0_i32_6 : i32 to index
    %c0_12 = arith.constant 0 : index
    %c0_13 = arith.constant 0 : index
    %37 = vector.load %arg4[%36, %c0_12, %c0_13] : memref<8x8x128xf32, #tpu.memory_space<vmem>>, vector<1x8x128xf32>
    %38 = vector.shape_cast %37 : vector<1x8x128xf32> to vector<8x128xf32>
    %39 = vector.shape_cast %35 : vector<8x128xf32> to vector<1x8x128xf32>
    tpu.vector_store %arg4[%36, %c0_12, %c0_13], %39 {strides = array<i32>} : memref<8x8x128xf32, #tpu.memory_space<vmem>>, vector<1x8x128xf32>,
    %c1_i32 = arith.constant 1 : i32
    %40 = arith.index_cast %c1_i32 : i32 to index
    %c0_14 = arith.constant 0 : index
    %c0_15 = arith.constant 0 : index
    %41 = vector.load %arg2[%40, %c0_14, %c0_15] : memref<8x8x512xf32, #tpu.memory_space<vmem>>, vector<1x8x512xf32>
    %42 = vector.shape_cast %41 : vector<1x8x512xf32> to vector<8x512xf32>
    %cst_16 = arith.constant dense<0.000000e+00> : vector<8x512xf32>
    %43 = tpu.matmul %35, %3, %cst_16 {dimension_numbers = #tpu.dot_dimension_numbers<[1], [0], [0], [1], [0, 0, 1, 1], [], []>} : vector<8x128xf32>, vector<128x512xf32>, vector<8x512xf32> -> vector<8x512xf32>
    %44 = arith.addf %42, %43 : vector<8x512xf32>
    %45 = vector.extract_strided_slice %44 {offsets = [0, 0], sizes = [8, 128], strides = [1, 1]} : vector<8x512xf32> to vector<8x128xf32>
    %46 = arith.negf %45 : vector<8x128xf32>
    %47 = math.exp %46 : vector<8x128xf32>
    %cst_17 = arith.constant 1.000000e+00 : f32
    %48 = vector.broadcast %cst_17 : f32 to vector<8x128xf32>
    %49 = arith.addf %48, %47 : vector<8x128xf32>
    %50 = arith.divf %48, %49 : vector<8x128xf32>
    %51 = vector.extract_strided_slice %44 {offsets = [0, 128], sizes = [8, 128], strides = [1, 1]} : vector<8x512xf32> to vector<8x128xf32>
    %52 = arith.negf %51 : vector<8x128xf32>
    %53 = math.exp %52 : vector<8x128xf32>
    %cst_18 = arith.constant 1.000000e+00 : f32
    %54 = vector.broadcast %cst_18 : f32 to vector<8x128xf32>
    %55 = arith.addf %54, %53 : vector<8x128xf32>
    %56 = arith.divf %54, %55 : vector<8x128xf32>
    %57 = vector.extract_strided_slice %44 {offsets = [0, 256], sizes = [8, 128], strides = [1, 1]} : vector<8x512xf32> to vector<8x128xf32>
    %58 = math.tanh %57 : vector<8x128xf32>
    %59 = vector.extract_strided_slice %44 {offsets = [0, 384], sizes = [8, 128], strides = [1, 1]} : vector<8x512xf32> to vector<8x128xf32>
    %60 = arith.negf %59 : vector<8x128xf32>
    %61 = math.exp %60 : vector<8x128xf32>
    %cst_19 = arith.constant 1.000000e+00 : f32
    %62 = vector.broadcast %cst_19 : f32 to vector<8x128xf32>
    %63 = arith.addf %62, %61 : vector<8x128xf32>
    %64 = arith.divf %62, %63 : vector<8x128xf32>
    %65 = arith.mulf %56, %33 : vector<8x128xf32>
    %66 = arith.mulf %50, %58 : vector<8x128xf32>
    %67 = arith.addf %65, %66 : vector<8x128xf32>
    %68 = math.tanh %67 : vector<8x128xf32>
    %69 = arith.mulf %64, %68 : vector<8x128xf32>
    %70 = arith.index_cast %c1_i32 : i32 to index
    %c0_20 = arith.constant 0 : index
    %c0_21 = arith.constant 0 : index
    %71 = vector.load %arg4[%70, %c0_20, %c0_21] : memref<8x8x128xf32, #tpu.memory_space<vmem>>, vector<1x8x128xf32>
    %72 = vector.shape_cast %71 : vector<1x8x128xf32> to vector<8x128xf32>
    %73 = vector.shape_cast %69 : vector<8x128xf32> to vector<1x8x128xf32>
    tpu.vector_store %arg4[%70, %c0_20, %c0_21], %73 {strides = array<i32>} : memref<8x8x128xf32, #tpu.memory_space<vmem>>, vector<1x8x128xf32>,
    %c2_i32 = arith.constant 2 : i32
    %74 = arith.index_cast %c2_i32 : i32 to index
    %c0_22 = arith.constant 0 : index
    %c0_23 = arith.constant 0 : index
    %75 = vector.load %arg2[%74, %c0_22, %c0_23] : memref<8x8x512xf32, #tpu.memory_space<vmem>>, vector<1x8x512xf32>
    %76 = vector.shape_cast %75 : vector<1x8x512xf32> to vector<8x512xf32>
    %cst_24 = arith.constant dense<0.000000e+00> : vector<8x512xf32>
    %77 = tpu.matmul %69, %3, %cst_24 {dimension_numbers = #tpu.dot_dimension_numbers<[1], [0], [0], [1], [0, 0, 1, 1], [], []>} : vector<8x128xf32>, vector<128x512xf32>, vector<8x512xf32> -> vector<8x512xf32>
    %78 = arith.addf %76, %77 : vector<8x512xf32>
    %79 = vector.extract_strided_slice %78 {offsets = [0, 0], sizes = [8, 128], strides = [1, 1]} : vector<8x512xf32> to vector<8x128xf32>
    %80 = arith.negf %79 : vector<8x128xf32>
    %81 = math.exp %80 : vector<8x128xf32>
    %cst_25 = arith.constant 1.000000e+00 : f32
    %82 = vector.broadcast %cst_25 : f32 to vector<8x128xf32>
    %83 = arith.addf %82, %81 : vector<8x128xf32>
    %84 = arith.divf %82, %83 : vector<8x128xf32>
    %85 = vector.extract_strided_slice %78 {offsets = [0, 128], sizes = [8, 128], strides = [1, 1]} : vector<8x512xf32> to vector<8x128xf32>
    %86 = arith.negf %85 : vector<8x128xf32>
    %87 = math.exp %86 : vector<8x128xf32>
    %cst_26 = arith.constant 1.000000e+00 : f32
    %88 = vector.broadcast %cst_26 : f32 to vector<8x128xf32>
    %89 = arith.addf %88, %87 : vector<8x128xf32>
    %90 = arith.divf %88, %89 : vector<8x128xf32>
    %91 = vector.extract_strided_slice %78 {offsets = [0, 256], sizes = [8, 128], strides = [1, 1]} : vector<8x512xf32> to vector<8x128xf32>
    %92 = math.tanh %91 : vector<8x128xf32>
    %93 = vector.extract_strided_slice %78 {offsets = [0, 384], sizes = [8, 128], strides = [1, 1]} : vector<8x512xf32> to vector<8x128xf32>
    %94 = arith.negf %93 : vector<8x128xf32>
    %95 = math.exp %94 : vector<8x128xf32>
    %cst_27 = arith.constant 1.000000e+00 : f32
    %96 = vector.broadcast %cst_27 : f32 to vector<8x128xf32>
    %97 = arith.addf %96, %95 : vector<8x128xf32>
    %98 = arith.divf %96, %97 : vector<8x128xf32>
    %99 = arith.mulf %90, %67 : vector<8x128xf32>
    %100 = arith.mulf %84, %92 : vector<8x128xf32>
    %101 = arith.addf %99, %100 : vector<8x128xf32>
    %102 = math.tanh %101 : vector<8x128xf32>
    %103 = arith.mulf %98, %102 : vector<8x128xf32>
    %104 = arith.index_cast %c2_i32 : i32 to index
    %c0_28 = arith.constant 0 : index
    %c0_29 = arith.constant 0 : index
    %105 = vector.load %arg4[%104, %c0_28, %c0_29] : memref<8x8x128xf32, #tpu.memory_space<vmem>>, vector<1x8x128xf32>
    %106 = vector.shape_cast %105 : vector<1x8x128xf32> to vector<8x128xf32>
    %107 = vector.shape_cast %103 : vector<8x128xf32> to vector<1x8x128xf32>
    tpu.vector_store %arg4[%104, %c0_28, %c0_29], %107 {strides = array<i32>} : memref<8x8x128xf32, #tpu.memory_space<vmem>>, vector<1x8x128xf32>,
    %c3_i32 = arith.constant 3 : i32
    %108 = arith.index_cast %c3_i32 : i32 to index
    %c0_30 = arith.constant 0 : index
    %c0_31 = arith.constant 0 : index
    %109 = vector.load %arg2[%108, %c0_30, %c0_31] : memref<8x8x512xf32, #tpu.memory_space<vmem>>, vector<1x8x512xf32>
    %110 = vector.shape_cast %109 : vector<1x8x512xf32> to vector<8x512xf32>
    %cst_32 = arith.constant dense<0.000000e+00> : vector<8x512xf32>
    %111 = tpu.matmul %103, %3, %cst_32 {dimension_numbers = #tpu.dot_dimension_numbers<[1], [0], [0], [1], [0, 0, 1, 1], [], []>} : vector<8x128xf32>, vector<128x512xf32>, vector<8x512xf32> -> vector<8x512xf32>
    %112 = arith.addf %110, %111 : vector<8x512xf32>
    %113 = vector.extract_strided_slice %112 {offsets = [0, 0], sizes = [8, 128], strides = [1, 1]} : vector<8x512xf32> to vector<8x128xf32>
    %114 = arith.negf %113 : vector<8x128xf32>
    %115 = math.exp %114 : vector<8x128xf32>
    %cst_33 = arith.constant 1.000000e+00 : f32
    %116 = vector.broadcast %cst_33 : f32 to vector<8x128xf32>
    %117 = arith.addf %116, %115 : vector<8x128xf32>
    %118 = arith.divf %116, %117 : vector<8x128xf32>
    %119 = vector.extract_strided_slice %112 {offsets = [0, 128], sizes = [8, 128], strides = [1, 1]} : vector<8x512xf32> to vector<8x128xf32>
    %120 = arith.negf %119 : vector<8x128xf32>
    %121 = math.exp %120 : vector<8x128xf32>
    %cst_34 = arith.constant 1.000000e+00 : f32
    %122 = vector.broadcast %cst_34 : f32 to vector<8x128xf32>
    %123 = arith.addf %122, %121 : vector<8x128xf32>
    %124 = arith.divf %122, %123 : vector<8x128xf32>
    %125 = vector.extract_strided_slice %112 {offsets = [0, 256], sizes = [8, 128], strides = [1, 1]} : vector<8x512xf32> to vector<8x128xf32>
    %126 = math.tanh %125 : vector<8x128xf32>
    %127 = vector.extract_strided_slice %112 {offsets = [0, 384], sizes = [8, 128], strides = [1, 1]} : vector<8x512xf32> to vector<8x128xf32>
    %128 = arith.negf %127 : vector<8x128xf32>
    %129 = math.exp %128 : vector<8x128xf32>
    %cst_35 = arith.constant 1.000000e+00 : f32
    %130 = vector.broadcast %cst_35 : f32 to vector<8x128xf32>
    %131 = arith.addf %130, %129 : vector<8x128xf32>
    %132 = arith.divf %130, %131 : vector<8x128xf32>
    %133 = arith.mulf %124, %101 : vector<8x128xf32>
    %134 = arith.mulf %118, %126 : vector<8x128xf32>
    %135 = arith.addf %133, %134 : vector<8x128xf32>
    %136 = math.tanh %135 : vector<8x128xf32>
    %137 = arith.mulf %132, %136 : vector<8x128xf32>
    %138 = arith.index_cast %c3_i32 : i32 to index
    %c0_36 = arith.constant 0 : index
    %c0_37 = arith.constant 0 : index
    %139 = vector.load %arg4[%138, %c0_36, %c0_37] : memref<8x8x128xf32, #tpu.memory_space<vmem>>, vector<1x8x128xf32>
    %140 = vector.shape_cast %139 : vector<1x8x128xf32> to vector<8x128xf32>
    %141 = vector.shape_cast %137 : vector<8x128xf32> to vector<1x8x128xf32>
    tpu.vector_store %arg4[%138, %c0_36, %c0_37], %141 {strides = array<i32>} : memref<8x8x128xf32, #tpu.memory_space<vmem>>, vector<1x8x128xf32>,
    %c4_i32 = arith.constant 4 : i32
    %142 = arith.index_cast %c4_i32 : i32 to index
    %c0_38 = arith.constant 0 : index
    %c0_39 = arith.constant 0 : index
    %143 = vector.load %arg2[%142, %c0_38, %c0_39] : memref<8x8x512xf32, #tpu.memory_space<vmem>>, vector<1x8x512xf32>
    %144 = vector.shape_cast %143 : vector<1x8x512xf32> to vector<8x512xf32>
    %cst_40 = arith.constant dense<0.000000e+00> : vector<8x512xf32>
    %145 = tpu.matmul %137, %3, %cst_40 {dimension_numbers = #tpu.dot_dimension_numbers<[1], [0], [0], [1], [0, 0, 1, 1], [], []>} : vector<8x128xf32>, vector<128x512xf32>, vector<8x512xf32> -> vector<8x512xf32>
    %146 = arith.addf %144, %145 : vector<8x512xf32>
    %147 = vector.extract_strided_slice %146 {offsets = [0, 0], sizes = [8, 128], strides = [1, 1]} : vector<8x512xf32> to vector<8x128xf32>
    %148 = arith.negf %147 : vector<8x128xf32>
    %149 = math.exp %148 : vector<8x128xf32>
    %cst_41 = arith.constant 1.000000e+00 : f32
    %150 = vector.broadcast %cst_41 : f32 to vector<8x128xf32>
    %151 = arith.addf %150, %149 : vector<8x128xf32>
    %152 = arith.divf %150, %151 : vector<8x128xf32>
    %153 = vector.extract_strided_slice %146 {offsets = [0, 128], sizes = [8, 128], strides = [1, 1]} : vector<8x512xf32> to vector<8x128xf32>
    %154 = arith.negf %153 : vector<8x128xf32>
    %155 = math.exp %154 : vector<8x128xf32>
    %cst_42 = arith.constant 1.000000e+00 : f32
    %156 = vector.broadcast %cst_42 : f32 to vector<8x128xf32>
    %157 = arith.addf %156, %155 : vector<8x128xf32>
    %158 = arith.divf %156, %157 : vector<8x128xf32>
    %159 = vector.extract_strided_slice %146 {offsets = [0, 256], sizes = [8, 128], strides = [1, 1]} : vector<8x512xf32> to vector<8x128xf32>
    %160 = math.tanh %159 : vector<8x128xf32>
    %161 = vector.extract_strided_slice %146 {offsets = [0, 384], sizes = [8, 128], strides = [1, 1]} : vector<8x512xf32> to vector<8x128xf32>
    %162 = arith.negf %161 : vector<8x128xf32>
    %163 = math.exp %162 : vector<8x128xf32>
    %cst_43 = arith.constant 1.000000e+00 : f32
    %164 = vector.broadcast %cst_43 : f32 to vector<8x128xf32>
    %165 = arith.addf %164, %163 : vector<8x128xf32>
    %166 = arith.divf %164, %165 : vector<8x128xf32>
    %167 = arith.mulf %158, %135 : vector<8x128xf32>
    %168 = arith.mulf %152, %160 : vector<8x128xf32>
    %169 = arith.addf %167, %168 : vector<8x128xf32>
    %170 = math.tanh %169 : vector<8x128xf32>
    %171 = arith.mulf %166, %170 : vector<8x128xf32>
    %172 = arith.index_cast %c4_i32 : i32 to index
    %c0_44 = arith.constant 0 : index
    %c0_45 = arith.constant 0 : index
    %173 = vector.load %arg4[%172, %c0_44, %c0_45] : memref<8x8x128xf32, #tpu.memory_space<vmem>>, vector<1x8x128xf32>
    %174 = vector.shape_cast %173 : vector<1x8x128xf32> to vector<8x128xf32>
    %175 = vector.shape_cast %171 : vector<8x128xf32> to vector<1x8x128xf32>
    tpu.vector_store %arg4[%172, %c0_44, %c0_45], %175 {strides = array<i32>} : memref<8x8x128xf32, #tpu.memory_space<vmem>>, vector<1x8x128xf32>,
    %c5_i32 = arith.constant 5 : i32
    %176 = arith.index_cast %c5_i32 : i32 to index
    %c0_46 = arith.constant 0 : index
    %c0_47 = arith.constant 0 : index
    %177 = vector.load %arg2[%176, %c0_46, %c0_47] : memref<8x8x512xf32, #tpu.memory_space<vmem>>, vector<1x8x512xf32>
    %178 = vector.shape_cast %177 : vector<1x8x512xf32> to vector<8x512xf32>
    %cst_48 = arith.constant dense<0.000000e+00> : vector<8x512xf32>
    %179 = tpu.matmul %171, %3, %cst_48 {dimension_numbers = #tpu.dot_dimension_numbers<[1], [0], [0], [1], [0, 0, 1, 1], [], []>} : vector<8x128xf32>, vector<128x512xf32>, vector<8x512xf32> -> vector<8x512xf32>
    %180 = arith.addf %178, %179 : vector<8x512xf32>
    %181 = vector.extract_strided_slice %180 {offsets = [0, 0], sizes = [8, 128], strides = [1, 1]} : vector<8x512xf32> to vector<8x128xf32>
    %182 = arith.negf %181 : vector<8x128xf32>
    %183 = math.exp %182 : vector<8x128xf32>
    %cst_49 = arith.constant 1.000000e+00 : f32
    %184 = vector.broadcast %cst_49 : f32 to vector<8x128xf32>
    %185 = arith.addf %184, %183 : vector<8x128xf32>
    %186 = arith.divf %184, %185 : vector<8x128xf32>
    %187 = vector.extract_strided_slice %180 {offsets = [0, 128], sizes = [8, 128], strides = [1, 1]} : vector<8x512xf32> to vector<8x128xf32>
    %188 = arith.negf %187 : vector<8x128xf32>
    %189 = math.exp %188 : vector<8x128xf32>
    %cst_50 = arith.constant 1.000000e+00 : f32
    %190 = vector.broadcast %cst_50 : f32 to vector<8x128xf32>
    %191 = arith.addf %190, %189 : vector<8x128xf32>
    %192 = arith.divf %190, %191 : vector<8x128xf32>
    %193 = vector.extract_strided_slice %180 {offsets = [0, 256], sizes = [8, 128], strides = [1, 1]} : vector<8x512xf32> to vector<8x128xf32>
    %194 = math.tanh %193 : vector<8x128xf32>
    %195 = vector.extract_strided_slice %180 {offsets = [0, 384], sizes = [8, 128], strides = [1, 1]} : vector<8x512xf32> to vector<8x128xf32>
    %196 = arith.negf %195 : vector<8x128xf32>
    %197 = math.exp %196 : vector<8x128xf32>
    %cst_51 = arith.constant 1.000000e+00 : f32
    %198 = vector.broadcast %cst_51 : f32 to vector<8x128xf32>
    %199 = arith.addf %198, %197 : vector<8x128xf32>
    %200 = arith.divf %198, %199 : vector<8x128xf32>
    %201 = arith.mulf %192, %169 : vector<8x128xf32>
    %202 = arith.mulf %186, %194 : vector<8x128xf32>
    %203 = arith.addf %201, %202 : vector<8x128xf32>
    %204 = math.tanh %203 : vector<8x128xf32>
    %205 = arith.mulf %200, %204 : vector<8x128xf32>
    %206 = arith.index_cast %c5_i32 : i32 to index
    %c0_52 = arith.constant 0 : index
    %c0_53 = arith.constant 0 : index
    %207 = vector.load %arg4[%206, %c0_52, %c0_53] : memref<8x8x128xf32, #tpu.memory_space<vmem>>, vector<1x8x128xf32>
    %208 = vector.shape_cast %207 : vector<1x8x128xf32> to vector<8x128xf32>
    %209 = vector.shape_cast %205 : vector<8x128xf32> to vector<1x8x128xf32>
    tpu.vector_store %arg4[%206, %c0_52, %c0_53], %209 {strides = array<i32>} : memref<8x8x128xf32, #tpu.memory_space<vmem>>, vector<1x8x128xf32>,
    %c6_i32 = arith.constant 6 : i32
    %210 = arith.index_cast %c6_i32 : i32 to index
    %c0_54 = arith.constant 0 : index
    %c0_55 = arith.constant 0 : index
    %211 = vector.load %arg2[%210, %c0_54, %c0_55] : memref<8x8x512xf32, #tpu.memory_space<vmem>>, vector<1x8x512xf32>
    %212 = vector.shape_cast %211 : vector<1x8x512xf32> to vector<8x512xf32>
    %cst_56 = arith.constant dense<0.000000e+00> : vector<8x512xf32>
    %213 = tpu.matmul %205, %3, %cst_56 {dimension_numbers = #tpu.dot_dimension_numbers<[1], [0], [0], [1], [0, 0, 1, 1], [], []>} : vector<8x128xf32>, vector<128x512xf32>, vector<8x512xf32> -> vector<8x512xf32>
    %214 = arith.addf %212, %213 : vector<8x512xf32>
    %215 = vector.extract_strided_slice %214 {offsets = [0, 0], sizes = [8, 128], strides = [1, 1]} : vector<8x512xf32> to vector<8x128xf32>
    %216 = arith.negf %215 : vector<8x128xf32>
    %217 = math.exp %216 : vector<8x128xf32>
    %cst_57 = arith.constant 1.000000e+00 : f32
    %218 = vector.broadcast %cst_57 : f32 to vector<8x128xf32>
    %219 = arith.addf %218, %217 : vector<8x128xf32>
    %220 = arith.divf %218, %219 : vector<8x128xf32>
    %221 = vector.extract_strided_slice %214 {offsets = [0, 128], sizes = [8, 128], strides = [1, 1]} : vector<8x512xf32> to vector<8x128xf32>
    %222 = arith.negf %221 : vector<8x128xf32>
    %223 = math.exp %222 : vector<8x128xf32>
    %cst_58 = arith.constant 1.000000e+00 : f32
    %224 = vector.broadcast %cst_58 : f32 to vector<8x128xf32>
    %225 = arith.addf %224, %223 : vector<8x128xf32>
    %226 = arith.divf %224, %225 : vector<8x128xf32>
    %227 = vector.extract_strided_slice %214 {offsets = [0, 256], sizes = [8, 128], strides = [1, 1]} : vector<8x512xf32> to vector<8x128xf32>
    %228 = math.tanh %227 : vector<8x128xf32>
    %229 = vector.extract_strided_slice %214 {offsets = [0, 384], sizes = [8, 128], strides = [1, 1]} : vector<8x512xf32> to vector<8x128xf32>
    %230 = arith.negf %229 : vector<8x128xf32>
    %231 = math.exp %230 : vector<8x128xf32>
    %cst_59 = arith.constant 1.000000e+00 : f32
    %232 = vector.broadcast %cst_59 : f32 to vector<8x128xf32>
    %233 = arith.addf %232, %231 : vector<8x128xf32>
    %234 = arith.divf %232, %233 : vector<8x128xf32>
    %235 = arith.mulf %226, %203 : vector<8x128xf32>
    %236 = arith.mulf %220, %228 : vector<8x128xf32>
    %237 = arith.addf %235, %236 : vector<8x128xf32>
    %238 = math.tanh %237 : vector<8x128xf32>
    %239 = arith.mulf %234, %238 : vector<8x128xf32>
    %240 = arith.index_cast %c6_i32 : i32 to index
    %c0_60 = arith.constant 0 : index
    %c0_61 = arith.constant 0 : index
    %241 = vector.load %arg4[%240, %c0_60, %c0_61] : memref<8x8x128xf32, #tpu.memory_space<vmem>>, vector<1x8x128xf32>
    %242 = vector.shape_cast %241 : vector<1x8x128xf32> to vector<8x128xf32>
    %243 = vector.shape_cast %239 : vector<8x128xf32> to vector<1x8x128xf32>
    tpu.vector_store %arg4[%240, %c0_60, %c0_61], %243 {strides = array<i32>} : memref<8x8x128xf32, #tpu.memory_space<vmem>>, vector<1x8x128xf32>,
    %c7_i32 = arith.constant 7 : i32
    %244 = arith.index_cast %c7_i32 : i32 to index
    %c0_62 = arith.constant 0 : index
    %c0_63 = arith.constant 0 : index
    %245 = vector.load %arg2[%244, %c0_62, %c0_63] : memref<8x8x512xf32, #tpu.memory_space<vmem>>, vector<1x8x512xf32>
    %246 = vector.shape_cast %245 : vector<1x8x512xf32> to vector<8x512xf32>
    %cst_64 = arith.constant dense<0.000000e+00> : vector<8x512xf32>
    %247 = tpu.matmul %239, %3, %cst_64 {dimension_numbers = #tpu.dot_dimension_numbers<[1], [0], [0], [1], [0, 0, 1, 1], [], []>} : vector<8x128xf32>, vector<128x512xf32>, vector<8x512xf32> -> vector<8x512xf32>
    %248 = arith.addf %246, %247 : vector<8x512xf32>
    %249 = vector.extract_strided_slice %248 {offsets = [0, 0], sizes = [8, 128], strides = [1, 1]} : vector<8x512xf32> to vector<8x128xf32>
    %250 = arith.negf %249 : vector<8x128xf32>
    %251 = math.exp %250 : vector<8x128xf32>
    %cst_65 = arith.constant 1.000000e+00 : f32
    %252 = vector.broadcast %cst_65 : f32 to vector<8x128xf32>
    %253 = arith.addf %252, %251 : vector<8x128xf32>
    %254 = arith.divf %252, %253 : vector<8x128xf32>
    %255 = vector.extract_strided_slice %248 {offsets = [0, 128], sizes = [8, 128], strides = [1, 1]} : vector<8x512xf32> to vector<8x128xf32>
    %256 = arith.negf %255 : vector<8x128xf32>
    %257 = math.exp %256 : vector<8x128xf32>
    %cst_66 = arith.constant 1.000000e+00 : f32
    %258 = vector.broadcast %cst_66 : f32 to vector<8x128xf32>
    %259 = arith.addf %258, %257 : vector<8x128xf32>
    %260 = arith.divf %258, %259 : vector<8x128xf32>
    %261 = vector.extract_strided_slice %248 {offsets = [0, 256], sizes = [8, 128], strides = [1, 1]} : vector<8x512xf32> to vector<8x128xf32>
    %262 = math.tanh %261 : vector<8x128xf32>
    %263 = vector.extract_strided_slice %248 {offsets = [0, 384], sizes = [8, 128], strides = [1, 1]} : vector<8x512xf32> to vector<8x128xf32>
    %264 = arith.negf %263 : vector<8x128xf32>
    %265 = math.exp %264 : vector<8x128xf32>
    %cst_67 = arith.constant 1.000000e+00 : f32
    %266 = vector.broadcast %cst_67 : f32 to vector<8x128xf32>
    %267 = arith.addf %266, %265 : vector<8x128xf32>
    %268 = arith.divf %266, %267 : vector<8x128xf32>
    %269 = arith.mulf %260, %237 : vector<8x128xf32>
    %270 = arith.mulf %254, %262 : vector<8x128xf32>
    %271 = arith.addf %269, %270 : vector<8x128xf32>
    %272 = math.tanh %271 : vector<8x128xf32>
    %273 = arith.mulf %268, %272 : vector<8x128xf32>
    %274 = arith.index_cast %c7_i32 : i32 to index
    %c0_68 = arith.constant 0 : index
    %c0_69 = arith.constant 0 : index
    %275 = vector.load %arg4[%274, %c0_68, %c0_69] : memref<8x8x128xf32, #tpu.memory_space<vmem>>, vector<1x8x128xf32>
    %276 = vector.shape_cast %275 : vector<1x8x128xf32> to vector<8x128xf32>
    %277 = vector.shape_cast %273 : vector<8x128xf32> to vector<1x8x128xf32>
    tpu.vector_store %arg4[%274, %c0_68, %c0_69], %277 {strides = array<i32>} : memref<8x8x128xf32, #tpu.memory_space<vmem>>, vector<1x8x128xf32>,
    %c8_i32 = arith.constant 8 : i32
    %c0_70 = arith.constant 0 : index
    %c0_71 = arith.constant 0 : index
    %278 = vector.load %arg7[%c0_70, %c0_71] : memref<8x128xf32, #tpu.memory_space<vmem>>, vector<8x128xf32>
    tpu.vector_store %arg7[%c0_70, %c0_71], %273 {strides = array<i32>} : memref<8x128xf32, #tpu.memory_space<vmem>>, vector<8x128xf32>,
    %c0_72 = arith.constant 0 : index
    %c0_73 = arith.constant 0 : index
    %279 = vector.load %arg8[%c0_72, %c0_73] : memref<8x128xf32, #tpu.memory_space<vmem>>, vector<8x128xf32>
    tpu.vector_store %arg8[%c0_72, %c0_73], %271 {strides = array<i32>} : memref<8x128xf32, #tpu.memory_space<vmem>>, vector<8x128xf32>,
    %c0_i32_74 = arith.constant 0 : i32
    %280 = arith.cmpi eq, %arg1, %c0_i32_74 : i32
    %281 = arith.extui %280 : i1 to i32
    %c0_i32_75 = arith.constant 0 : i32
    %282 = arith.cmpi ne, %281, %c0_i32_75 : i32
    scf.if %282 {
      %c0_76 = arith.constant 0 : index
      %c0_77 = arith.constant 0 : index
      %283 = vector.load %arg5[%c0_76, %c0_77] : memref<8x128xf32, #tpu.memory_space<vmem>>, vector<8x128xf32>
      tpu.vector_store %arg5[%c0_76, %c0_77], %273 {strides = array<i32>} : memref<8x128xf32, #tpu.memory_space<vmem>>, vector<8x128xf32>,
      %c0_78 = arith.constant 0 : index
      %c0_79 = arith.constant 0 : index
      %284 = vector.load %arg6[%c0_78, %c0_79] : memref<8x128xf32, #tpu.memory_space<vmem>>, vector<8x128xf32>
      tpu.vector_store %arg6[%c0_78, %c0_79], %271 {strides = array<i32>} : memref<8x128xf32, #tpu.memory_space<vmem>>, vector<8x128xf32>,
    } else {
    }
    return
  }
  func.func @transform_0(%arg0: i32, %arg1: i32) -> (i32, i32, i32) {
    %c0_i32 = arith.constant 0 : i32
    %c0_i32_0 = arith.constant 0 : i32
    return %arg1, %arg0, %c0_i32 : i32, i32, i32
  }
  func.func @transform_1(%arg0: i32, %arg1: i32) -> (i32, i32) {
    %c0_i32 = arith.constant 0 : i32
    %c0_i32_0 = arith.constant 0 : i32
    %c0_i32_1 = arith.constant 0 : i32
    return %c0_i32, %c0_i32_0 : i32, i32
  }
  func.func @transform_2(%arg0: i32, %arg1: i32) -> (i32, i32, i32) {
    %c0_i32 = arith.constant 0 : i32
    %c0_i32_0 = arith.constant 0 : i32
    return %arg1, %arg0, %c0_i32 : i32, i32, i32
  }
  func.func @transform_3(%arg0: i32, %arg1: i32) -> (i32, i32) {
    %c0_i32 = arith.constant 0 : i32
    %c0_i32_0 = arith.constant 0 : i32
    return %arg0, %c0_i32 : i32, i32
  }
  func.func @transform_4(%arg0: i32, %arg1: i32) -> (i32, i32) {
    %c0_i32 = arith.constant 0 : i32
    %c0_i32_0 = arith.constant 0 : i32
    return %arg0, %c0_i32 : i32, i32
  }
}

</mosaic_0001>

<llo_original>
// kernel: rnn_forward.1
$region0: #{rnn_forward.1}
  #allocation0 [shape = 'u32[]', space=smem, size = 0x4, offset = 0x4, fixed_abs, tag = 'smem constant byte address 0x4 - core index']
  #allocation1 [shape = 'u32[144,128]{1,0:T(1,128)}', space=vmem, size = 0x12000, scoped, tag = 'internal scratch']
  #allocation2 [shape = 'f32[8,128]{1,0:T(8,128)}', space=vmem, size = 0x1000, scoped, tag = 'scratch operand']
  #allocation3 [shape = 'f32[8,128]{1,0:T(8,128)}', space=vmem, size = 0x1000, scoped, tag = 'scratch operand']
  %s0 = inlined_call_operand.vmem [shape: f32[8,8,512], index: 0, kind: input, shape index: {}]
  %s1 = inlined_call_operand.hbm [shape: f32[128,512], index: 1, kind: input, shape index: {}]
  %s2 = inlined_call_operand.vmem [shape: f32[8,8,128], index: 2, kind: output, shape index: {0}]
  %s3 = inlined_call_operand.vmem [shape: f32[8,128], index: 3, kind: output, shape index: {1}]
  %s4 = inlined_call_operand.vmem [shape: f32[8,128], index: 4, kind: output, shape index: {2}]
  %5 = xla_tuple %s2, %s3, %s4
  %s6 = sld [smem:[#allocation0]]
  $region46: #{rnn_forward.1} parent=0
    _
  %s8 = ssub.s32 1, %s6
  %s9 = scalar_select 0, %s8, %s6
  $region1: #{rnn_forward.1} parent=0
    #allocation4 [shape = 'u8[262144]{0}', space=vmem, size = 0x40000, scoped, tag = 'input window, operand 1, single buffered']
    #allocation5 [shape = 's32[1]{0}', space=sflag, size = 0x4, scoped, tag = 'scoped memory for rnn_forward.1']
    %10 = vsyncpa [#allocation5], 0
    // Predicated region
    $region2: #{rnn_forward.1} parent=1 // pred_check
      _
    $region3: #{rnn_forward.1} parent=1 // pred_check_branch
      %12 = sbr.rel (0) target = $region5
    $region4: #{rnn_forward.1} parent=1 // pred_region
      _
    $region5: #{rnn_forward.1} parent=1 // pred_fallthru
      _
    // Predicated region
    $region6: #{rnn_forward.1} parent=1 // pred_check
      _
    $region7: #{rnn_forward.1} parent=1 // pred_check_branch
      %14 = sbr.rel (0) target = $region9
    $region8: #{rnn_forward.1} parent=1 // pred_region
      %s16 = ssub.s32 8192, 8192
      %17 = vsyncadd [#allocation5], %s16
      %s18 = sshll.u32 [#allocation4], 4
      %s19 = int_to_ptr.vmem [resolvable:$true] %s18
      %24 = dma.hbm_to_vmem [thread:$0]  %s1, 8192, %s19, [#allocation5], 512, 512, 32
    $region9: #{rnn_forward.1} parent=1 // pred_fallthru
      _
    // Predicated region
    $region10: #{rnn_forward.1} parent=1 // pred_check
      _
    $region11: #{rnn_forward.1} parent=1 // pred_check_branch
      %26 = sbr.rel (0) target = $region13
    $region12: #{rnn_forward.1} parent=1 // pred_region
      %27 = dma.done [#allocation5], 8192
    $region13: #{rnn_forward.1} parent=1 // pred_fallthru
      _
    %p28 = scmp.eq.s32.totalorder 0, 0
    // Predicated region
    $region14: #{rnn_forward.1} parent=1 // pred_check
      %p29 = pneg %p28
    $region15: #{rnn_forward.1} parent=1 // pred_check_branch
      %31 = sbr.rel (%p29) target = $region17
    $region16: #{rnn_forward.1} parent=1 // pred_region
      %32 = vst [vmem:[#allocation2] sm:$0xff] 0.0
      %33 = vst [vmem:[#allocation3] sm:$0xff] 0.0
    $region17: #{rnn_forward.1} parent=1 // pred_fallthru
      _
    %v34 = vld [vmem:[#allocation4] sm:$0xff]
    %v35 = vld [vmem:[#allocation4 + $0x8] sm:$0xff]
    %v36 = vld [vmem:[#allocation4 + $0x10] sm:$0xff]
    %v37 = vld [vmem:[#allocation4 + $0x18] sm:$0xff]
    %v38 = vld [vmem:[#allocation4 + $0x20] sm:$0xff]
    %v39 = vld [vmem:[#allocation4 + $0x28] sm:$0xff]
    %v40 = vld [vmem:[#allocation4 + $0x30] sm:$0xff]
    %v41 = vld [vmem:[#allocation4 + $0x38] sm:$0xff]
    %v42 = vld [vmem:[#allocation4 + $0x40] sm:$0xff]
    %v43 = vld [vmem:[#allocation4 + $0x48] sm:$0xff]
    %v44 = vld [vmem:[#allocation4 + $0x50] sm:$0xff]
    %v45 = vld [vmem:[#allocation4 + $0x58] sm:$0xff]
    %v46 = vld [vmem:[#allocation4 + $0x60] sm:$0xff]
    %v47 = vld [vmem:[#allocation4 + $0x68] sm:$0xff]
    %v48 = vld [vmem:[#allocation4 + $0x70] sm:$0xff]
    %v49 = vld [vmem:[#allocation4 + $0x78] sm:$0xff]
    %v50 = vld [vmem:[#allocation4 + $0x80] sm:$0xff]
    %v51 = vld [vmem:[#allocation4 + $0x88] sm:$0xff]
    %v52 = vld [vmem:[#allocation4 + $0x90] sm:$0xff]
    %v53 = vld [vmem:[#allocation4 + $0x98] sm:$0xff]
    %v54 = vld [vmem:[#allocation4 + $0xa0] sm:$0xff]
    %v55 = vld [vmem:[#allocation4 + $0xa8] sm:$0xff]
    %v56 = vld [vmem:[#allocation4 + $0xb0] sm:$0xff]
    %v57 = vld [vmem:[#allocation4 + $0xb8] sm:$0xff]
    %v58 = vld [vmem:[#allocation4 + $0xc0] sm:$0xff]
    %v59 = vld [vmem:[#allocation4 + $0xc8] sm:$0xff]
    %v60 = vld [vmem:[#allocation4 + $0xd0] sm:$0xff]
    %v61 = vld [vmem:[#allocation4 + $0xd8] sm:$0xff]
    %v62 = vld [vmem:[#allocation4 + $0xe0] sm:$0xff]
    %v63 = vld [vmem:[#allocation4 + $0xe8] sm:$0xff]
    %v64 = vld [vmem:[#allocation4 + $0xf0] sm:$0xff]
    %v65 = vld [vmem:[#allocation4 + $0xf8] sm:$0xff]
    %v66 = vld [vmem:[#allocation4 + $0x100] sm:$0xff]
    %v67 = vld [vmem:[#allocation4 + $0x108] sm:$0xff]
    %v68 = vld [vmem:[#allocation4 + $0x110] sm:$0xff]
    %v69 = vld [vmem:[#allocation4 + $0x118] sm:$0xff]
    %v70 = vld [vmem:[#allocation4 + $0x120] sm:$0xff]
    %v71 = vld [vmem:[#allocation4 + $0x128] sm:$0xff]
    %v72 = vld [vmem:[#allocation4 + $0x130] sm:$0xff]
    %v73 = vld [vmem:[#allocation4 + $0x138] sm:$0xff]
    %v74 = vld [vmem:[#allocation4 + $0x140] sm:$0xff]
    %v75 = vld [vmem:[#allocation4 + $0x148] sm:$0xff]
    %v76 = vld [vmem:[#allocation4 + $0x150] sm:$0xff]
    %v77 = vld [vmem:[#allocation4 + $0x158] sm:$0xff]
    %v78 = vld [vmem:[#allocation4 + $0x160] sm:$0xff]
    %v79 = vld [vmem:[#allocation4 + $0x168] sm:$0xff]
    %v80 = vld [vmem:[#allocation4 + $0x170] sm:$0xff]
    %v81 = vld [vmem:[#allocation4 + $0x178] sm:$0xff]
    %v82 = vld [vmem:[#allocation4 + $0x180] sm:$0xff]
    %v83 = vld [vmem:[#allocation4 + $0x188] sm:$0xff]
    %v84 = vld [vmem:[#allocation4 + $0x190] sm:$0xff]
    %v85 = vld [vmem:[#allocation4 + $0x198] sm:$0xff]
    %v86 = vld [vmem:[#allocation4 + $0x1a0] sm:$0xff]
    %v87 = vld [vmem:[#allocation4 + $0x1a8] sm:$0xff]
    %v88 = vld [vmem:[#allocation4 + $0x1b0] sm:$0xff]
    %v89 = vld [vmem:[#allocation4 + $0x1b8] sm:$0xff]
    %v90 = vld [vmem:[#allocation4 + $0x1c0] sm:$0xff]
    %v91 = vld [vmem:[#allocation4 + $0x1c8] sm:$0xff]
    %v92 = vld [vmem:[#allocation4 + $0x1d0] sm:$0xff]
    %v93 = vld [vmem:[#allocation4 + $0x1d8] sm:$0xff]
    %v94 = vld [vmem:[#allocation4 + $0x1e0] sm:$0xff]
    %v95 = vld [vmem:[#allocation4 + $0x1e8] sm:$0xff]
    %v96 = vld [vmem:[#allocation4 + $0x1f0] sm:$0xff]
    %v97 = vld [vmem:[#allocation4 + $0x1f8] sm:$0xff]
    %v98 = vld [vmem:[#allocation2] sm:$0xff]
    %v99 = vld [vmem:[#allocation3] sm:$0xff]
    %v100 = vld [vmem:[%s0] sm:$0xff]
    %v101 = vld [vmem:[%s0 + $0x8] sm:$0xff]
    %v102 = vld [vmem:[%s0 + $0x10] sm:$0xff]
    %v103 = vld [vmem:[%s0 + $0x18] sm:$0xff]
    %104 = vmatprep.subr.mxu0 %v35
    %105 = vmatpush1.msra.mxu0 %v34
    %106 = vmatprep.subr.mxu0 %v39
    %107 = vmatpush1.msra.mxu0 %v38
    %108 = vmatprep.subr.mxu0 %v43
    %109 = vmatpush1.msra.mxu0 %v42
    %110 = vmatprep.subr.mxu0 %v47
    %111 = vmatpush1.msra.mxu0 %v46
    %112 = vmatprep.subr.mxu0 %v51
    %113 = vmatpush1.msra.mxu0 %v50
    %114 = vmatprep.subr.mxu0 %v55
    %115 = vmatpush1.msra.mxu0 %v54
    %116 = vmatprep.subr.mxu0 %v59
    %117 = vmatpush1.msra.mxu0 %v58
    %118 = vmatprep.subr.mxu0 %v63
    %119 = vmatpush1.msra.mxu0 %v62
    %120 = vmatprep.subr.mxu0 %v67
    %121 = vmatpush1.msra.mxu0 %v66
    %122 = vmatprep.subr.mxu0 %v71
    %123 = vmatpush1.msra.mxu0 %v70
    %124 = vmatprep.subr.mxu0 %v75
    %125 = vmatpush1.msra.mxu0 %v74
    %126 = vmatprep.subr.mxu0 %v79
    %127 = vmatpush1.msra.mxu0 %v78
    %128 = vmatprep.subr.mxu0 %v83
    %129 = vmatpush1.msra.mxu0 %v82
    %130 = vmatprep.subr.mxu0 %v87
    %131 = vmatpush1.msra.mxu0 %v86
    %132 = vmatprep.subr.mxu0 %v91
    %133 = vmatpush1.msra.mxu0 %v90
    %134 = vmatprep.subr.mxu0 %v95
    %135 = vmatpush1.msra.mxu0 %v94
    %136 = vmatprep.subr.mxu0 0.0
    %137 = vmatpush1.msra.mxu0 0.0
    %138 = vmatprep.subr.mxu0 0.0
    %139 = vmatpush1.msra.mxu0 0.0
    %140 = vmatprep.subr.mxu0 0.0
    %141 = vmatpush1.msra.mxu0 0.0
    %142 = vmatprep.subr.mxu0 0.0
    %143 = vmatpush1.msra.mxu0 0.0
    %144 = vmatprep.subr.mxu0 0.0
    %145 = vmatpush1.msra.mxu0 0.0
    %146 = vmatprep.subr.mxu0 0.0
    %147 = vmatpush1.msra.mxu0 0.0
    %148 = vmatprep.subr.mxu0 0.0
    %149 = vmatpush1.msra.mxu0 0.0
    %150 = vmatprep.subr.mxu0 0.0
    %151 = vmatpush1.msra.mxu0 0.0
    %152 = vmatprep.subr.mxu0 0.0
    %153 = vmatpush1.msra.mxu0 0.0
    %154 = vmatprep.subr.mxu0 0.0
    %155 = vmatpush1.msra.mxu0 0.0
    %156 = vmatprep.subr.mxu0 0.0
    %157 = vmatpush1.msra.mxu0 0.0
    %158 = vmatprep.subr.mxu0 0.0
    %159 = vmatpush1.msra.mxu0 0.0
    %160 = vmatprep.subr.mxu0 0.0
    %161 = vmatpush1.msra.mxu0 0.0
    %162 = vmatprep.subr.mxu0 0.0
    %163 = vmatpush1.msra.mxu0 0.0
    %164 = vmatprep.subr.mxu0 0.0
    %165 = vmatpush1.msra.mxu0 0.0
    %166 = vmatprep.subr.mxu0 0.0
    %167 = vmatpush1.msra.mxu0 0.0
    %168 = vmatprep.mubr.f32.mxu0 0.0
    %169 = vmatmul.mubr.f32.gmra.mrb[0].mxu0 %v98
    %v170 = vpop.f32.mrb[0].mxu0
    %v171 = vadd.f32 0.0, %v170
    %v172 = vpop.f32.mrb[0].mxu0
    %v173 = vadd.f32 0.0, %v172
    %174 = vdwg.mxu0
    %175 = vmatprep.subr.mxu0 %v37
    %176 = vmatpush1.msra.mxu0 %v36
    %177 = vmatprep.subr.mxu0 %v41
    %178 = vmatpush1.msra.mxu0 %v40
    %179 = vmatprep.subr.mxu0 %v45
    %180 = vmatpush1.msra.mxu0 %v44
    %181 = vmatprep.subr.mxu0 %v49
    %182 = vmatpush1.msra.mxu0 %v48
    %183 = vmatprep.subr.mxu0 %v53
    %184 = vmatpush1.msra.mxu0 %v52
    %185 = vmatprep.subr.mxu0 %v57
    %186 = vmatpush1.msra.mxu0 %v56
    %187 = vmatprep.subr.mxu0 %v61
    %188 = vmatpush1.msra.mxu0 %v60
    %189 = vmatprep.subr.mxu0 %v65
    %190 = vmatpush1.msra.mxu0 %v64
    %191 = vmatprep.subr.mxu0 %v69
    %192 = vmatpush1.msra.mxu0 %v68
    %193 = vmatprep.subr.mxu0 %v73
    %194 = vmatpush1.msra.mxu0 %v72
    %195 = vmatprep.subr.mxu0 %v77
    %196 = vmatpush1.msra.mxu0 %v76
    %197 = vmatprep.subr.mxu0 %v81
    %198 = vmatpush1.msra.mxu0 %v80
    %199 = vmatprep.subr.mxu0 %v85
    %200 = vmatpush1.msra.mxu0 %v84
    %201 = vmatprep.subr.mxu0 %v89
    %202 = vmatpush1.msra.mxu0 %v88
    %203 = vmatprep.subr.mxu0 %v93
    %204 = vmatpush1.msra.mxu0 %v92
    %205 = vmatprep.subr.mxu0 %v97
    %206 = vmatpush1.msra.mxu0 %v96
    %207 = vmatprep.subr.mxu0 0.0
    %208 = vmatpush1.msra.mxu0 0.0
    %209 = vmatprep.subr.mxu0 0.0
    %210 = vmatpush1.msra.mxu0 0.0
    %211 = vmatprep.subr.mxu0 0.0
    %212 = vmatpush1.msra.mxu0 0.0
    %213 = vmatprep.subr.mxu0 0.0
    %214 = vmatpush1.msra.mxu0 0.0
    %215 = vmatprep.subr.mxu0 0.0
    %216 = vmatpush1.msra.mxu0 0.0
    %217 = vmatprep.subr.mxu0 0.0
    %218 = vmatpush1.msra.mxu0 0.0
    %219 = vmatprep.subr.mxu0 0.0
    %220 = vmatpush1.msra.mxu0 0.0
    %221 = vmatprep.subr.mxu0 0.0
    %222 = vmatpush1.msra.mxu0 0.0
    %223 = vmatprep.subr.mxu0 0.0
    %224 = vmatpush1.msra.mxu0 0.0
    %225 = vmatprep.subr.mxu0 0.0
    %226 = vmatpush1.msra.mxu0 0.0
    %227 = vmatprep.subr.mxu0 0.0
    %228 = vmatpush1.msra.mxu0 0.0
    %229 = vmatprep.subr.mxu0 0.0
    %230 = vmatpush1.msra.mxu0 0.0
    %231 = vmatprep.subr.mxu0 0.0
    %232 = vmatpush1.msra.mxu0 0.0
    %233 = vmatprep.subr.mxu0 0.0
    %234 = vmatpush1.msra.mxu0 0.0
    %235 = vmatprep.subr.mxu0 0.0
    %236 = vmatpush1.msra.mxu0 0.0
    %237 = vmatprep.subr.mxu0 0.0
    %238 = vmatpush1.msra.mxu0 0.0
    %239 = vmatprep.mubr.f32.mxu0 0.0
    %240 = vmatmul.mubr.f32.gmra.mrb[0].mxu0 %v98
    %v241 = vpop.f32.mrb[0].mxu0
    %v242 = vadd.f32 0.0, %v241
    %v243 = vpop.f32.mrb[0].mxu0
    %v244 = vadd.f32 0.0, %v243
    %245 = vdwg.mxu0
    %v246 = vadd.f32 %v100, %v171
    %v247 = vadd.f32 %v101, %v173
    %v248 = vadd.f32 %v102, %v242
    %v249 = vadd.f32 %v103, %v244
    %v250 = vxor.u32 %v246, 2147483648
    %v251 = vmul.f32 %v250, 1.442695
    %v252 = vpow.pop %v251
    %v253 = vadd.f32 %v252, 1.0
    %v254 = vrcp.pop %v253
    %v255 = vmul.f32 1.0, %v254
    %v256 = vxor.u32 %v247, 2147483648
    %v257 = vmul.f32 %v256, 1.442695
    %v258 = vpow.pop %v257
    %v259 = vadd.f32 %v258, 1.0
    %v260 = vrcp.pop %v259
    %v261 = vmul.f32 1.0, %v260
    %v262 = vtanh.pop %v248
    %v263 = vxor.u32 %v249, 2147483648
    %v264 = vmul.f32 %v263, 1.442695
    %v265 = vpow.pop %v264
    %v266 = vadd.f32 %v265, 1.0
    %v267 = vrcp.pop %v266
    %v268 = vmul.f32 1.0, %v267
    %v269 = vmul.f32 %v261, %v99
    %v270 = vmul.f32 %v255, %v262
    %v271 = vadd.f32 %v269, %v270
    %v272 = vtanh.pop %v271
    %v273 = vmul.f32 %v268, %v272
    %274 = vst [vmem:[%s2] sm:$0xff] %v273
    %s275 = scalar_lea.vmem %s0, 32
    %v276 = vld [vmem:[%s275] sm:$0xff]
    %v277 = vld [vmem:[%s275 + $0x8] sm:$0xff]
    %v278 = vld [vmem:[%s275 + $0x10] sm:$0xff]
    %v279 = vld [vmem:[%s275 + $0x18] sm:$0xff]
    %280 = vmatprep.subr.mxu0 %v35
    %281 = vmatpush1.msra.mxu0 %v34
    %282 = vmatprep.subr.mxu0 %v39
    %283 = vmatpush1.msra.mxu0 %v38
    %284 = vmatprep.subr.mxu0 %v43
    %285 = vmatpush1.msra.mxu0 %v42
    %286 = vmatprep.subr.mxu0 %v47
    %287 = vmatpush1.msra.mxu0 %v46
    %288 = vmatprep.subr.mxu0 %v51
    %289 = vmatpush1.msra.mxu0 %v50
    %290 = vmatprep.subr.mxu0 %v55
    %291 = vmatpush1.msra.mxu0 %v54
    %292 = vmatprep.subr.mxu0 %v59
    %293 = vmatpush1.msra.mxu0 %v58
    %294 = vmatprep.subr.mxu0 %v63
    %295 = vmatpush1.msra.mxu0 %v62
    %296 = vmatprep.subr.mxu0 %v67
    %297 = vmatpush1.msra.mxu0 %v66
    %298 = vmatprep.subr.mxu0 %v71
    %299 = vmatpush1.msra.mxu0 %v70
    %300 = vmatprep.subr.mxu0 %v75
    %301 = vmatpush1.msra.mxu0 %v74
    %302 = vmatprep.subr.mxu0 %v79
    %303 = vmatpush1.msra.mxu0 %v78
    %304 = vmatprep.subr.mxu0 %v83
    %305 = vmatpush1.msra.mxu0 %v82
    %306 = vmatprep.subr.mxu0 %v87
    %307 = vmatpush1.msra.mxu0 %v86
    %308 = vmatprep.subr.mxu0 %v91
    %309 = vmatpush1.msra.mxu0 %v90
    %310 = vmatprep.subr.mxu0 %v95
    %311 = vmatpush1.msra.mxu0 %v94
    %312 = vmatprep.subr.mxu0 0.0
    %313 = vmatpush1.msra.mxu0 0.0
    %314 = vmatprep.subr.mxu0 0.0
    %315 = vmatpush1.msra.mxu0 0.0
    %316 = vmatprep.subr.mxu0 0.0
    %317 = vmatpush1.msra.mxu0 0.0
    %318 = vmatprep.subr.mxu0 0.0
    %319 = vmatpush1.msra.mxu0 0.0
    %320 = vmatprep.subr.mxu0 0.0
    %321 = vmatpush1.msra.mxu0 0.0
    %322 = vmatprep.subr.mxu0 0.0
    %323 = vmatpush1.msra.mxu0 0.0
    %324 = vmatprep.subr.mxu0 0.0
    %325 = vmatpush1.msra.mxu0 0.0
    %326 = vmatprep.subr.mxu0 0.0
    %327 = vmatpush1.msra.mxu0 0.0
    %328 = vmatprep.subr.mxu0 0.0
    %329 = vmatpush1.msra.mxu0 0.0
    %330 = vmatprep.subr.mxu0 0.0
    %331 = vmatpush1.msra.mxu0 0.0
    %332 = vmatprep.subr.mxu0 0.0
    %333 = vmatpush1.msra.mxu0 0.0
    %334 = vmatprep.subr.mxu0 0.0
    %335 = vmatpush1.msra.mxu0 0.0
    %336 = vmatprep.subr.mxu0 0.0
    %337 = vmatpush1.msra.mxu0 0.0
    %338 = vmatprep.subr.mxu0 0.0
    %339 = vmatpush1.msra.mxu0 0.0
    %340 = vmatprep.subr.mxu0 0.0
    %341 = vmatpush1.msra.mxu0 0.0
    %342 = vmatprep.subr.mxu0 0.0
    %343 = vmatpush1.msra.mxu0 0.0
    %344 = vmatprep.mubr.f32.mxu0 0.0
    %345 = vmatmul.mubr.f32.gmra.mrb[0].mxu0 %v273
    %v346 = vpop.f32.mrb[0].mxu0
    %v347 = vadd.f32 0.0, %v346
    %v348 = vpop.f32.mrb[0].mxu0
    %v349 = vadd.f32 0.0, %v348
    %350 = vdwg.mxu0
    %351 = vmatprep.subr.mxu0 %v37
    %352 = vmatpush1.msra.mxu0 %v36
    %353 = vmatprep.subr.mxu0 %v41
    %354 = vmatpush1.msra.mxu0 %v40
    %355 = vmatprep.subr.mxu0 %v45
    %356 = vmatpush1.msra.mxu0 %v44
    %357 = vmatprep.subr.mxu0 %v49
    %358 = vmatpush1.msra.mxu0 %v48
    %359 = vmatprep.subr.mxu0 %v53
    %360 = vmatpush1.msra.mxu0 %v52
    %361 = vmatprep.subr.mxu0 %v57
    %362 = vmatpush1.msra.mxu0 %v56
    %363 = vmatprep.subr.mxu0 %v61
    %364 = vmatpush1.msra.mxu0 %v60
    %365 = vmatprep.subr.mxu0 %v65
    %366 = vmatpush1.msra.mxu0 %v64
    %367 = vmatprep.subr.mxu0 %v69
    %368 = vmatpush1.msra.mxu0 %v68
    %369 = vmatprep.subr.mxu0 %v73
    %370 = vmatpush1.msra.mxu0 %v72
    %371 = vmatprep.subr.mxu0 %v77
    %372 = vmatpush1.msra.mxu0 %v76
    %373 = vmatprep.subr.mxu0 %v81
    %374 = vmatpush1.msra.mxu0 %v80
    %375 = vmatprep.subr.mxu0 %v85
    %376 = vmatpush1.msra.mxu0 %v84
    %377 = vmatprep.subr.mxu0 %v89
    %378 = vmatpush1.msra.mxu0 %v88
    %379 = vmatprep.subr.mxu0 %v93
    %380 = vmatpush1.msra.mxu0 %v92
    %381 = vmatprep.subr.mxu0 %v97
    %382 = vmatpush1.msra.mxu0 %v96
    %383 = vmatprep.subr.mxu0 0.0
    %384 = vmatpush1.msra.mxu0 0.0
    %385 = vmatprep.subr.mxu0 0.0
    %386 = vmatpush1.msra.mxu0 0.0
    %387 = vmatprep.subr.mxu0 0.0
    %388 = vmatpush1.msra.mxu0 0.0
    %389 = vmatprep.subr.mxu0 0.0
    %390 = vmatpush1.msra.mxu0 0.0
    %391 = vmatprep.subr.mxu0 0.0
    %392 = vmatpush1.msra.mxu0 0.0
    %393 = vmatprep.subr.mxu0 0.0
    %394 = vmatpush1.msra.mxu0 0.0
    %395 = vmatprep.subr.mxu0 0.0
    %396 = vmatpush1.msra.mxu0 0.0
    %397 = vmatprep.subr.mxu0 0.0
    %398 = vmatpush1.msra.mxu0 0.0
    %399 = vmatprep.subr.mxu0 0.0
    %400 = vmatpush1.msra.mxu0 0.0
    %401 = vmatprep.subr.mxu0 0.0
    %402 = vmatpush1.msra.mxu0 0.0
    %403 = vmatprep.subr.mxu0 0.0
    %404 = vmatpush1.msra.mxu0 0.0
    %405 = vmatprep.subr.mxu0 0.0
    %406 = vmatpush1.msra.mxu0 0.0
    %407 = vmatprep.subr.mxu0 0.0
    %408 = vmatpush1.msra.mxu0 0.0
    %409 = vmatprep.subr.mxu0 0.0
    %410 = vmatpush1.msra.mxu0 0.0
    %411 = vmatprep.subr.mxu0 0.0
    %412 = vmatpush1.msra.mxu0 0.0
    %413 = vmatprep.subr.mxu0 0.0
    %414 = vmatpush1.msra.mxu0 0.0
    %415 = vmatprep.mubr.f32.mxu0 0.0
    %416 = vmatmul.mubr.f32.gmra.mrb[0].mxu0 %v273
    %v417 = vpop.f32.mrb[0].mxu0
    %v418 = vadd.f32 0.0, %v417
    %v419 = vpop.f32.mrb[0].mxu0
    %v420 = vadd.f32 0.0, %v419
    %421 = vdwg.mxu0
    %v422 = vadd.f32 %v276, %v347
    %v423 = vadd.f32 %v277, %v349
    %v424 = vadd.f32 %v278, %v418
    %v425 = vadd.f32 %v279, %v420
    %v426 = vxor.u32 %v422, 2147483648
    %v427 = vmul.f32 %v426, 1.442695
    %v428 = vpow.pop %v427
    %v429 = vadd.f32 %v428, 1.0
    %v430 = vrcp.pop %v429
    %v431 = vmul.f32 1.0, %v430
    %v432 = vxor.u32 %v423, 2147483648
    %v433 = vmul.f32 %v432, 1.442695
    %v434 = vpow.pop %v433
    %v435 = vadd.f32 %v434, 1.0
    %v436 = vrcp.pop %v435
    %v437 = vmul.f32 1.0, %v436
    %v438 = vtanh.pop %v424
    %v439 = vxor.u32 %v425, 2147483648
    %v440 = vmul.f32 %v439, 1.442695
    %v441 = vpow.pop %v440
    %v442 = vadd.f32 %v441, 1.0
    %v443 = vrcp.pop %v442
    %v444 = vmul.f32 1.0, %v443
    %v445 = vmul.f32 %v437, %v271
    %v446 = vmul.f32 %v431, %v438
    %v447 = vadd.f32 %v445, %v446
    %v448 = vtanh.pop %v447
    %v449 = vmul.f32 %v444, %v448
    %s450 = scalar_lea.vmem %s2, 8
    %451 = vst [vmem:[%s450] sm:$0xff] %v449
    %s452 = scalar_lea.vmem %s0, 64
    %v453 = vld [vmem:[%s452] sm:$0xff]
    %v454 = vld [vmem:[%s452 + $0x8] sm:$0xff]
    %v455 = vld [vmem:[%s452 + $0x10] sm:$0xff]
    %v456 = vld [vmem:[%s452 + $0x18] sm:$0xff]
    %457 = vmatprep.subr.mxu0 %v35
    %458 = vmatpush1.msra.mxu0 %v34
    %459 = vmatprep.subr.mxu0 %v39
    %460 = vmatpush1.msra.mxu0 %v38
    %461 = vmatprep.subr.mxu0 %v43
    %462 = vmatpush1.msra.mxu0 %v42
    %463 = vmatprep.subr.mxu0 %v47
    %464 = vmatpush1.msra.mxu0 %v46
    %465 = vmatprep.subr.mxu0 %v51
    %466 = vmatpush1.msra.mxu0 %v50
    %467 = vmatprep.subr.mxu0 %v55
    %468 = vmatpush1.msra.mxu0 %v54
    %469 = vmatprep.subr.mxu0 %v59
    %470 = vmatpush1.msra.mxu0 %v58
    %471 = vmatprep.subr.mxu0 %v63
    %472 = vmatpush1.msra.mxu0 %v62
    %473 = vmatprep.subr.mxu0 %v67
    %474 = vmatpush1.msra.mxu0 %v66
    %475 = vmatprep.subr.mxu0 %v71
    %476 = vmatpush1.msra.mxu0 %v70
    %477 = vmatprep.subr.mxu0 %v75
    %478 = vmatpush1.msra.mxu0 %v74
    %479 = vmatprep.subr.mxu0 %v79
    %480 = vmatpush1.msra.mxu0 %v78
    %481 = vmatprep.subr.mxu0 %v83
    %482 = vmatpush1.msra.mxu0 %v82
    %483 = vmatprep.subr.mxu0 %v87
    %484 = vmatpush1.msra.mxu0 %v86
    %485 = vmatprep.subr.mxu0 %v91
    %486 = vmatpush1.msra.mxu0 %v90
    %487 = vmatprep.subr.mxu0 %v95
    %488 = vmatpush1.msra.mxu0 %v94
    %489 = vmatprep.subr.mxu0 0.0
    %490 = vmatpush1.msra.mxu0 0.0
    %491 = vmatprep.subr.mxu0 0.0
    %492 = vmatpush1.msra.mxu0 0.0
    %493 = vmatprep.subr.mxu0 0.0
    %494 = vmatpush1.msra.mxu0 0.0
    %495 = vmatprep.subr.mxu0 0.0
    %496 = vmatpush1.msra.mxu0 0.0
    %497 = vmatprep.subr.mxu0 0.0
    %498 = vmatpush1.msra.mxu0 0.0
    %499 = vmatprep.subr.mxu0 0.0
    %500 = vmatpush1.msra.mxu0 0.0
    %501 = vmatprep.subr.mxu0 0.0
    %502 = vmatpush1.msra.mxu0 0.0
    %503 = vmatprep.subr.mxu0 0.0
    %504 = vmatpush1.msra.mxu0 0.0
    %505 = vmatprep.subr.mxu0 0.0
    %506 = vmatpush1.msra.mxu0 0.0
    %507 = vmatprep.subr.mxu0 0.0
    %508 = vmatpush1.msra.mxu0 0.0
    %509 = vmatprep.subr.mxu0 0.0
    %510 = vmatpush1.msra.mxu0 0.0
    %511 = vmatprep.subr.mxu0 0.0
    %512 = vmatpush1.msra.mxu0 0.0
    %513 = vmatprep.subr.mxu0 0.0
    %514 = vmatpush1.msra.mxu0 0.0
    %515 = vmatprep.subr.mxu0 0.0
    %516 = vmatpush1.msra.mxu0 0.0
    %517 = vmatprep.subr.mxu0 0.0
    %518 = vmatpush1.msra.mxu0 0.0
    %519 = vmatprep.subr.mxu0 0.0
    %520 = vmatpush1.msra.mxu0 0.0
    %521 = vmatprep.mubr.f32.mxu0 0.0
    %522 = vmatmul.mubr.f32.gmra.mrb[0].mxu0 %v449
    %v523 = vpop.f32.mrb[0].mxu0
    %v524 = vadd.f32 0.0, %v523
    %v525 = vpop.f32.mrb[0].mxu0
    %v526 = vadd.f32 0.0, %v525
    %527 = vdwg.mxu0
    %528 = vmatprep.subr.mxu0 %v37
    %529 = vmatpush1.msra.mxu0 %v36
    %530 = vmatprep.subr.mxu0 %v41
    %531 = vmatpush1.msra.mxu0 %v40
    %532 = vmatprep.subr.mxu0 %v45
    %533 = vmatpush1.msra.mxu0 %v44
    %534 = vmatprep.subr.mxu0 %v49
    %535 = vmatpush1.msra.mxu0 %v48
    %536 = vmatprep.subr.mxu0 %v53
    %537 = vmatpush1.msra.mxu0 %v52
    %538 = vmatprep.subr.mxu0 %v57
    %539 = vmatpush1.msra.mxu0 %v56
    %540 = vmatprep.subr.mxu0 %v61
    %541 = vmatpush1.msra.mxu0 %v60
    %542 = vmatprep.subr.mxu0 %v65
    %543 = vmatpush1.msra.mxu0 %v64
    %544 = vmatprep.subr.mxu0 %v69
    %545 = vmatpush1.msra.mxu0 %v68
    %546 = vmatprep.subr.mxu0 %v73
    %547 = vmatpush1.msra.mxu0 %v72
    %548 = vmatprep.subr.mxu0 %v77
    %549 = vmatpush1.msra.mxu0 %v76
    %550 = vmatprep.subr.mxu0 %v81
    %551 = vmatpush1.msra.mxu0 %v80
    %552 = vmatprep.subr.mxu0 %v85
    %553 = vmatpush1.msra.mxu0 %v84
    %554 = vmatprep.subr.mxu0 %v89
    %555 = vmatpush1.msra.mxu0 %v88
    %556 = vmatprep.subr.mxu0 %v93
    %557 = vmatpush1.msra.mxu0 %v92
    %558 = vmatprep.subr.mxu0 %v97
    %559 = vmatpush1.msra.mxu0 %v96
    %560 = vmatprep.subr.mxu0 0.0
    %561 = vmatpush1.msra.mxu0 0.0
    %562 = vmatprep.subr.mxu0 0.0
    %563 = vmatpush1.msra.mxu0 0.0
    %564 = vmatprep.subr.mxu0 0.0
    %565 = vmatpush1.msra.mxu0 0.0
    %566 = vmatprep.subr.mxu0 0.0
    %567 = vmatpush1.msra.mxu0 0.0
    %568 = vmatprep.subr.mxu0 0.0
    %569 = vmatpush1.msra.mxu0 0.0
    %570 = vmatprep.subr.mxu0 0.0
    %571 = vmatpush1.msra.mxu0 0.0
    %572 = vmatprep.subr.mxu0 0.0
    %573 = vmatpush1.msra.mxu0 0.0
    %574 = vmatprep.subr.mxu0 0.0
    %575 = vmatpush1.msra.mxu0 0.0
    %576 = vmatprep.subr.mxu0 0.0
    %577 = vmatpush1.msra.mxu0 0.0
    %578 = vmatprep.subr.mxu0 0.0
    %579 = vmatpush1.msra.mxu0 0.0
    %580 = vmatprep.subr.mxu0 0.0
    %581 = vmatpush1.msra.mxu0 0.0
    %582 = vmatprep.subr.mxu0 0.0
    %583 = vmatpush1.msra.mxu0 0.0
    %584 = vmatprep.subr.mxu0 0.0
    %585 = vmatpush1.msra.mxu0 0.0
    %586 = vmatprep.subr.mxu0 0.0
    %587 = vmatpush1.msra.mxu0 0.0
    %588 = vmatprep.subr.mxu0 0.0
    %589 = vmatpush1.msra.mxu0 0.0
    %590 = vmatprep.subr.mxu0 0.0
    %591 = vmatpush1.msra.mxu0 0.0
    %592 = vmatprep.mubr.f32.mxu0 0.0
    %593 = vmatmul.mubr.f32.gmra.mrb[0].mxu0 %v449
    %v594 = vpop.f32.mrb[0].mxu0
    %v595 = vadd.f32 0.0, %v594
    %v596 = vpop.f32.mrb[0].mxu0
    %v597 = vadd.f32 0.0, %v596
    %598 = vdwg.mxu0
    %v599 = vadd.f32 %v453, %v524
    %v600 = vadd.f32 %v454, %v526
    %v601 = vadd.f32 %v455, %v595
    %v602 = vadd.f32 %v456, %v597
    %v603 = vxor.u32 %v599, 2147483648
    %v604 = vmul.f32 %v603, 1.442695
    %v605 = vpow.pop %v604
    %v606 = vadd.f32 %v605, 1.0
    %v607 = vrcp.pop %v606
    %v608 = vmul.f32 1.0, %v607
    %v609 = vxor.u32 %v600, 2147483648
    %v610 = vmul.f32 %v609, 1.442695
    %v611 = vpow.pop %v610
    %v612 = vadd.f32 %v611, 1.0
    %v613 = vrcp.pop %v612
    %v614 = vmul.f32 1.0, %v613
    %v615 = vtanh.pop %v601
    %v616 = vxor.u32 %v602, 2147483648
    %v617 = vmul.f32 %v616, 1.442695
    %v618 = vpow.pop %v617
    %v619 = vadd.f32 %v618, 1.0
    %v620 = vrcp.pop %v619
    %v621 = vmul.f32 1.0, %v620
    %v622 = vmul.f32 %v614, %v447
    %v623 = vmul.f32 %v608, %v615
    %v624 = vadd.f32 %v622, %v623
    %v625 = vtanh.pop %v624
    %v626 = vmul.f32 %v621, %v625
    %s627 = scalar_lea.vmem %s2, 16
    %628 = vst [vmem:[%s627] sm:$0xff] %v626
    %s629 = scalar_lea.vmem %s0, 96
    %v630 = vld [vmem:[%s629] sm:$0xff]
    %v631 = vld [vmem:[%s629 + $0x8] sm:$0xff]
    %v632 = vld [vmem:[%s629 + $0x10] sm:$0xff]
    %v633 = vld [vmem:[%s629 + $0x18] sm:$0xff]
    %634 = vmatprep.subr.mxu0 %v35
    %635 = vmatpush1.msra.mxu0 %v34
    %636 = vmatprep.subr.mxu0 %v39
    %637 = vmatpush1.msra.mxu0 %v38
    %638 = vmatprep.subr.mxu0 %v43
    %639 = vmatpush1.msra.mxu0 %v42
    %640 = vmatprep.subr.mxu0 %v47
    %641 = vmatpush1.msra.mxu0 %v46
    %642 = vmatprep.subr.mxu0 %v51
    %643 = vmatpush1.msra.mxu0 %v50
    %644 = vmatprep.subr.mxu0 %v55
    %645 = vmatpush1.msra.mxu0 %v54
    %646 = vmatprep.subr.mxu0 %v59
    %647 = vmatpush1.msra.mxu0 %v58
    %648 = vmatprep.subr.mxu0 %v63
    %649 = vmatpush1.msra.mxu0 %v62
    %650 = vmatprep.subr.mxu0 %v67
    %651 = vmatpush1.msra.mxu0 %v66
    %652 = vmatprep.subr.mxu0 %v71
    %653 = vmatpush1.msra.mxu0 %v70
    %654 = vmatprep.subr.mxu0 %v75
    %655 = vmatpush1.msra.mxu0 %v74
    %656 = vmatprep.subr.mxu0 %v79
    %657 = vmatpush1.msra.mxu0 %v78
    %658 = vmatprep.subr.mxu0 %v83
    %659 = vmatpush1.msra.mxu0 %v82
    %660 = vmatprep.subr.mxu0 %v87
    %661 = vmatpush1.msra.mxu0 %v86
    %662 = vmatprep.subr.mxu0 %v91
    %663 = vmatpush1.msra.mxu0 %v90
    %664 = vmatprep.subr.mxu0 %v95
    %665 = vmatpush1.msra.mxu0 %v94
    %666 = vmatprep.subr.mxu0 0.0
    %667 = vmatpush1.msra.mxu0 0.0
    %668 = vmatprep.subr.mxu0 0.0
    %669 = vmatpush1.msra.mxu0 0.0
    %670 = vmatprep.subr.mxu0 0.0
    %671 = vmatpush1.msra.mxu0 0.0
    %672 = vmatprep.subr.mxu0 0.0
    %673 = vmatpush1.msra.mxu0 0.0
    %674 = vmatprep.subr.mxu0 0.0
    %675 = vmatpush1.msra.mxu0 0.0
    %676 = vmatprep.subr.mxu0 0.0
    %677 = vmatpush1.msra.mxu0 0.0
    %678 = vmatprep.subr.mxu0 0.0
    %679 = vmatpush1.msra.mxu0 0.0
    %680 = vmatprep.subr.mxu0 0.0
    %681 = vmatpush1.msra.mxu0 0.0
    %682 = vmatprep.subr.mxu0 0.0
    %683 = vmatpush1.msra.mxu0 0.0
    %684 = vmatprep.subr.mxu0 0.0
    %685 = vmatpush1.msra.mxu0 0.0
    %686 = vmatprep.subr.mxu0 0.0
    %687 = vmatpush1.msra.mxu0 0.0
    %688 = vmatprep.subr.mxu0 0.0
    %689 = vmatpush1.msra.mxu0 0.0
    %690 = vmatprep.subr.mxu0 0.0
    %691 = vmatpush1.msra.mxu0 0.0
    %692 = vmatprep.subr.mxu0 0.0
    %693 = vmatpush1.msra.mxu0 0.0
    %694 = vmatprep.subr.mxu0 0.0
    %695 = vmatpush1.msra.mxu0 0.0
    %696 = vmatprep.subr.mxu0 0.0
    %697 = vmatpush1.msra.mxu0 0.0
    %698 = vmatprep.mubr.f32.mxu0 0.0
    %699 = vmatmul.mubr.f32.gmra.mrb[0].mxu0 %v626
    %v700 = vpop.f32.mrb[0].mxu0
    %v701 = vadd.f32 0.0, %v700
    %v702 = vpop.f32.mrb[0].mxu0
    %v703 = vadd.f32 0.0, %v702
    %704 = vdwg.mxu0
    %705 = vmatprep.subr.mxu0 %v37
    %706 = vmatpush1.msra.mxu0 %v36
    %707 = vmatprep.subr.mxu0 %v41
    %708 = vmatpush1.msra.mxu0 %v40
    %709 = vmatprep.subr.mxu0 %v45
    %710 = vmatpush1.msra.mxu0 %v44
    %711 = vmatprep.subr.mxu0 %v49
    %712 = vmatpush1.msra.mxu0 %v48
    %713 = vmatprep.subr.mxu0 %v53
    %714 = vmatpush1.msra.mxu0 %v52
    %715 = vmatprep.subr.mxu0 %v57
    %716 = vmatpush1.msra.mxu0 %v56
    %717 = vmatprep.subr.mxu0 %v61
    %718 = vmatpush1.msra.mxu0 %v60
    %719 = vmatprep.subr.mxu0 %v65
    %720 = vmatpush1.msra.mxu0 %v64
    %721 = vmatprep.subr.mxu0 %v69
    %722 = vmatpush1.msra.mxu0 %v68
    %723 = vmatprep.subr.mxu0 %v73
    %724 = vmatpush1.msra.mxu0 %v72
    %725 = vmatprep.subr.mxu0 %v77
    %726 = vmatpush1.msra.mxu0 %v76
    %727 = vmatprep.subr.mxu0 %v81
    %728 = vmatpush1.msra.mxu0 %v80
    %729 = vmatprep.subr.mxu0 %v85
    %730 = vmatpush1.msra.mxu0 %v84
    %731 = vmatprep.subr.mxu0 %v89
    %732 = vmatpush1.msra.mxu0 %v88
    %733 = vmatprep.subr.mxu0 %v93
    %734 = vmatpush1.msra.mxu0 %v92
    %735 = vmatprep.subr.mxu0 %v97
    %736 = vmatpush1.msra.mxu0 %v96
    %737 = vmatprep.subr.mxu0 0.0
    %738 = vmatpush1.msra.mxu0 0.0
    %739 = vmatprep.subr.mxu0 0.0
    %740 = vmatpush1.msra.mxu0 0.0
    %741 = vmatprep.subr.mxu0 0.0
    %742 = vmatpush1.msra.mxu0 0.0
    %743 = vmatprep.subr.mxu0 0.0
    %744 = vmatpush1.msra.mxu0 0.0
    %745 = vmatprep.subr.mxu0 0.0
    %746 = vmatpush1.msra.mxu0 0.0
    %747 = vmatprep.subr.mxu0 0.0
    %748 = vmatpush1.msra.mxu0 0.0
    %749 = vmatprep.subr.mxu0 0.0
    %750 = vmatpush1.msra.mxu0 0.0
    %751 = vmatprep.subr.mxu0 0.0
    %752 = vmatpush1.msra.mxu0 0.0
    %753 = vmatprep.subr.mxu0 0.0
    %754 = vmatpush1.msra.mxu0 0.0
    %755 = vmatprep.subr.mxu0 0.0
    %756 = vmatpush1.msra.mxu0 0.0
    %757 = vmatprep.subr.mxu0 0.0
    %758 = vmatpush1.msra.mxu0 0.0
    %759 = vmatprep.subr.mxu0 0.0
    %760 = vmatpush1.msra.mxu0 0.0
    %761 = vmatprep.subr.mxu0 0.0
    %762 = vmatpush1.msra.mxu0 0.0
    %763 = vmatprep.subr.mxu0 0.0
    %764 = vmatpush1.msra.mxu0 0.0
    %765 = vmatprep.subr.mxu0 0.0
    %766 = vmatpush1.msra.mxu0 0.0
    %767 = vmatprep.subr.mxu0 0.0
    %768 = vmatpush1.msra.mxu0 0.0
    %769 = vmatprep.mubr.f32.mxu0 0.0
    %770 = vmatmul.mubr.f32.gmra.mrb[0].mxu0 %v626
    %v771 = vpop.f32.mrb[0].mxu0
    %v772 = vadd.f32 0.0, %v771
    %v773 = vpop.f32.mrb[0].mxu0
    %v774 = vadd.f32 0.0, %v773
    %775 = vdwg.mxu0
    %v776 = vadd.f32 %v630, %v701
    %v777 = vadd.f32 %v631, %v703
    %v778 = vadd.f32 %v632, %v772
    %v779 = vadd.f32 %v633, %v774
    %v780 = vxor.u32 %v776, 2147483648
    %v781 = vmul.f32 %v780, 1.442695
    %v782 = vpow.pop %v781
    %v783 = vadd.f32 %v782, 1.0
    %v784 = vrcp.pop %v783
    %v785 = vmul.f32 1.0, %v784
    %v786 = vxor.u32 %v777, 2147483648
    %v787 = vmul.f32 %v786, 1.442695
    %v788 = vpow.pop %v787
    %v789 = vadd.f32 %v788, 1.0
    %v790 = vrcp.pop %v789
    %v791 = vmul.f32 1.0, %v790
    %v792 = vtanh.pop %v778
    %v793 = vxor.u32 %v779, 2147483648
    %v794 = vmul.f32 %v793, 1.442695
    %v795 = vpow.pop %v794
    %v796 = vadd.f32 %v795, 1.0
    %v797 = vrcp.pop %v796
    %v798 = vmul.f32 1.0, %v797
    %v799 = vmul.f32 %v791, %v624
    %v800 = vmul.f32 %v785, %v792
    %v801 = vadd.f32 %v799, %v800
    %v802 = vtanh.pop %v801
    %v803 = vmul.f32 %v798, %v802
    %s804 = scalar_lea.vmem %s2, 24
    %805 = vst [vmem:[%s804] sm:$0xff] %v803
    %s806 = scalar_lea.vmem %s0, 128
    %v807 = vld [vmem:[%s806] sm:$0xff]
    %v808 = vld [vmem:[%s806 + $0x8] sm:$0xff]
    %v809 = vld [vmem:[%s806 + $0x10] sm:$0xff]
    %v810 = vld [vmem:[%s806 + $0x18] sm:$0xff]
    %811 = vmatprep.subr.mxu0 %v35
    %812 = vmatpush1.msra.mxu0 %v34
    %813 = vmatprep.subr.mxu0 %v39
    %814 = vmatpush1.msra.mxu0 %v38
    %815 = vmatprep.subr.mxu0 %v43
    %816 = vmatpush1.msra.mxu0 %v42
    %817 = vmatprep.subr.mxu0 %v47
    %818 = vmatpush1.msra.mxu0 %v46
    %819 = vmatprep.subr.mxu0 %v51
    %820 = vmatpush1.msra.mxu0 %v50
    %821 = vmatprep.subr.mxu0 %v55
    %822 = vmatpush1.msra.mxu0 %v54
    %823 = vmatprep.subr.mxu0 %v59
    %824 = vmatpush1.msra.mxu0 %v58
    %825 = vmatprep.subr.mxu0 %v63
    %826 = vmatpush1.msra.mxu0 %v62
    %827 = vmatprep.subr.mxu0 %v67
    %828 = vmatpush1.msra.mxu0 %v66
    %829 = vmatprep.subr.mxu0 %v71
    %830 = vmatpush1.msra.mxu0 %v70
    %831 = vmatprep.subr.mxu0 %v75
    %832 = vmatpush1.msra.mxu0 %v74
    %833 = vmatprep.subr.mxu0 %v79
    %834 = vmatpush1.msra.mxu0 %v78
    %835 = vmatprep.subr.mxu0 %v83
    %836 = vmatpush1.msra.mxu0 %v82
    %837 = vmatprep.subr.mxu0 %v87
    %838 = vmatpush1.msra.mxu0 %v86
    %839 = vmatprep.subr.mxu0 %v91
    %840 = vmatpush1.msra.mxu0 %v90
    %841 = vmatprep.subr.mxu0 %v95
    %842 = vmatpush1.msra.mxu0 %v94
    %843 = vmatprep.subr.mxu0 0.0
    %844 = vmatpush1.msra.mxu0 0.0
    %845 = vmatprep.subr.mxu0 0.0
    %846 = vmatpush1.msra.mxu0 0.0
    %847 = vmatprep.subr.mxu0 0.0
    %848 = vmatpush1.msra.mxu0 0.0
    %849 = vmatprep.subr.mxu0 0.0
    %850 = vmatpush1.msra.mxu0 0.0
    %851 = vmatprep.subr.mxu0 0.0
    %852 = vmatpush1.msra.mxu0 0.0
    %853 = vmatprep.subr.mxu0 0.0
    %854 = vmatpush1.msra.mxu0 0.0
    %855 = vmatprep.subr.mxu0 0.0
    %856 = vmatpush1.msra.mxu0 0.0
    %857 = vmatprep.subr.mxu0 0.0
    %858 = vmatpush1.msra.mxu0 0.0
    %859 = vmatprep.subr.mxu0 0.0
    %860 = vmatpush1.msra.mxu0 0.0
    %861 = vmatprep.subr.mxu0 0.0
    %862 = vmatpush1.msra.mxu0 0.0
    %863 = vmatprep.subr.mxu0 0.0
    %864 = vmatpush1.msra.mxu0 0.0
    %865 = vmatprep.subr.mxu0 0.0
    %866 = vmatpush1.msra.mxu0 0.0
    %867 = vmatprep.subr.mxu0 0.0
    %868 = vmatpush1.msra.mxu0 0.0
    %869 = vmatprep.subr.mxu0 0.0
    %870 = vmatpush1.msra.mxu0 0.0
    %871 = vmatprep.subr.mxu0 0.0
    %872 = vmatpush1.msra.mxu0 0.0
    %873 = vmatprep.subr.mxu0 0.0
    %874 = vmatpush1.msra.mxu0 0.0
    %875 = vmatprep.mubr.f32.mxu0 0.0
    %876 = vmatmul.mubr.f32.gmra.mrb[0].mxu0 %v803
    %v877 = vpop.f32.mrb[0].mxu0
    %v878 = vadd.f32 0.0, %v877
    %v879 = vpop.f32.mrb[0].mxu0
    %v880 = vadd.f32 0.0, %v879
    %881 = vdwg.mxu0
    %882 = vmatprep.subr.mxu0 %v37
    %883 = vmatpush1.msra.mxu0 %v36
    %884 = vmatprep.subr.mxu0 %v41
    %885 = vmatpush1.msra.mxu0 %v40
    %886 = vmatprep.subr.mxu0 %v45
    %887 = vmatpush1.msra.mxu0 %v44
    %888 = vmatprep.subr.mxu0 %v49
    %889 = vmatpush1.msra.mxu0 %v48
    %890 = vmatprep.subr.mxu0 %v53
    %891 = vmatpush1.msra.mxu0 %v52
    %892 = vmatprep.subr.mxu0 %v57
    %893 = vmatpush1.msra.mxu0 %v56
    %894 = vmatprep.subr.mxu0 %v61
    %895 = vmatpush1.msra.mxu0 %v60
    %896 = vmatprep.subr.mxu0 %v65
    %897 = vmatpush1.msra.mxu0 %v64
    %898 = vmatprep.subr.mxu0 %v69
    %899 = vmatpush1.msra.mxu0 %v68
    %900 = vmatprep.subr.mxu0 %v73
    %901 = vmatpush1.msra.mxu0 %v72
    %902 = vmatprep.subr.mxu0 %v77
    %903 = vmatpush1.msra.mxu0 %v76
    %904 = vmatprep.subr.mxu0 %v81
    %905 = vmatpush1.msra.mxu0 %v80
    %906 = vmatprep.subr.mxu0 %v85
    %907 = vmatpush1.msra.mxu0 %v84
    %908 = vmatprep.subr.mxu0 %v89
    %909 = vmatpush1.msra.mxu0 %v88
    %910 = vmatprep.subr.mxu0 %v93
    %911 = vmatpush1.msra.mxu0 %v92
    %912 = vmatprep.subr.mxu0 %v97
    %913 = vmatpush1.msra.mxu0 %v96
    %914 = vmatprep.subr.mxu0 0.0
    %915 = vmatpush1.msra.mxu0 0.0
    %916 = vmatprep.subr.mxu0 0.0
    %917 = vmatpush1.msra.mxu0 0.0
    %918 = vmatprep.subr.mxu0 0.0
    %919 = vmatpush1.msra.mxu0 0.0
    %920 = vmatprep.subr.mxu0 0.0
    %921 = vmatpush1.msra.mxu0 0.0
    %922 = vmatprep.subr.mxu0 0.0
    %923 = vmatpush1.msra.mxu0 0.0
    %924 = vmatprep.subr.mxu0 0.0
    %925 = vmatpush1.msra.mxu0 0.0
    %926 = vmatprep.subr.mxu0 0.0
    %927 = vmatpush1.msra.mxu0 0.0
    %928 = vmatprep.subr.mxu0 0.0
    %929 = vmatpush1.msra.mxu0 0.0
    %930 = vmatprep.subr.mxu0 0.0
    %931 = vmatpush1.msra.mxu0 0.0
    %932 = vmatprep.subr.mxu0 0.0
    %933 = vmatpush1.msra.mxu0 0.0
    %934 = vmatprep.subr.mxu0 0.0
    %935 = vmatpush1.msra.mxu0 0.0
    %936 = vmatprep.subr.mxu0 0.0
    %937 = vmatpush1.msra.mxu0 0.0
    %938 = vmatprep.subr.mxu0 0.0
    %939 = vmatpush1.msra.mxu0 0.0
    %940 = vmatprep.subr.mxu0 0.0
    %941 = vmatpush1.msra.mxu0 0.0
    %942 = vmatprep.subr.mxu0 0.0
    %943 = vmatpush1.msra.mxu0 0.0
    %944 = vmatprep.subr.mxu0 0.0
    %945 = vmatpush1.msra.mxu0 0.0
    %946 = vmatprep.mubr.f32.mxu0 0.0
    %947 = vmatmul.mubr.f32.gmra.mrb[0].mxu0 %v803
    %v948 = vpop.f32.mrb[0].mxu0
    %v949 = vadd.f32 0.0, %v948
    %v950 = vpop.f32.mrb[0].mxu0
    %v951 = vadd.f32 0.0, %v950
    %952 = vdwg.mxu0
    %v953 = vadd.f32 %v807, %v878
    %v954 = vadd.f32 %v808, %v880
    %v955 = vadd.f32 %v809, %v949
    %v956 = vadd.f32 %v810, %v951
    %v957 = vxor.u32 %v953, 2147483648
    %v958 = vmul.f32 %v957, 1.442695
    %v959 = vpow.pop %v958
    %v960 = vadd.f32 %v959, 1.0
    %v961 = vrcp.pop %v960
    %v962 = vmul.f32 1.0, %v961
    %v963 = vxor.u32 %v954, 2147483648
    %v964 = vmul.f32 %v963, 1.442695
    %v965 = vpow.pop %v964
    %v966 = vadd.f32 %v965, 1.0
    %v967 = vrcp.pop %v966
    %v968 = vmul.f32 1.0, %v967
    %v969 = vtanh.pop %v955
    %v970 = vxor.u32 %v956, 2147483648
    %v971 = vmul.f32 %v970, 1.442695
    %v972 = vpow.pop %v971
    %v973 = vadd.f32 %v972, 1.0
    %v974 = vrcp.pop %v973
    %v975 = vmul.f32 1.0, %v974
    %v976 = vmul.f32 %v968, %v801
    %v977 = vmul.f32 %v962, %v969
    %v978 = vadd.f32 %v976, %v977
    %v979 = vtanh.pop %v978
    %v980 = vmul.f32 %v975, %v979
    %s981 = scalar_lea.vmem %s2, 32
    %982 = vst [vmem:[%s981] sm:$0xff] %v980
    %s983 = scalar_lea.vmem %s0, 160
    %v984 = vld [vmem:[%s983] sm:$0xff]
    %v985 = vld [vmem:[%s983 + $0x8] sm:$0xff]
    %v986 = vld [vmem:[%s983 + $0x10] sm:$0xff]
    %v987 = vld [vmem:[%s983 + $0x18] sm:$0xff]
    %988 = vmatprep.subr.mxu0 %v35
    %989 = vmatpush1.msra.mxu0 %v34
    %990 = vmatprep.subr.mxu0 %v39
    %991 = vmatpush1.msra.mxu0 %v38
    %992 = vmatprep.subr.mxu0 %v43
    %993 = vmatpush1.msra.mxu0 %v42
    %994 = vmatprep.subr.mxu0 %v47
    %995 = vmatpush1.msra.mxu0 %v46
    %996 = vmatprep.subr.mxu0 %v51
    %997 = vmatpush1.msra.mxu0 %v50
    %998 = vmatprep.subr.mxu0 %v55
    %999 = vmatpush1.msra.mxu0 %v54
    %1000 = vmatprep.subr.mxu0 %v59
    %1001 = vmatpush1.msra.mxu0 %v58
    %1002 = vmatprep.subr.mxu0 %v63
    %1003 = vmatpush1.msra.mxu0 %v62
    %1004 = vmatprep.subr.mxu0 %v67
    %1005 = vmatpush1.msra.mxu0 %v66
    %1006 = vmatprep.subr.mxu0 %v71
    %1007 = vmatpush1.msra.mxu0 %v70
    %1008 = vmatprep.subr.mxu0 %v75
    %1009 = vmatpush1.msra.mxu0 %v74
    %1010 = vmatprep.subr.mxu0 %v79
    %1011 = vmatpush1.msra.mxu0 %v78
    %1012 = vmatprep.subr.mxu0 %v83
    %1013 = vmatpush1.msra.mxu0 %v82
    %1014 = vmatprep.subr.mxu0 %v87
    %1015 = vmatpush1.msra.mxu0 %v86
    %1016 = vmatprep.subr.mxu0 %v91
    %1017 = vmatpush1.msra.mxu0 %v90
    %1018 = vmatprep.subr.mxu0 %v95
    %1019 = vmatpush1.msra.mxu0 %v94
    %1020 = vmatprep.subr.mxu0 0.0
    %1021 = vmatpush1.msra.mxu0 0.0
    %1022 = vmatprep.subr.mxu0 0.0
    %1023 = vmatpush1.msra.mxu0 0.0
    %1024 = vmatprep.subr.mxu0 0.0
    %1025 = vmatpush1.msra.mxu0 0.0
    %1026 = vmatprep.subr.mxu0 0.0
    %1027 = vmatpush1.msra.mxu0 0.0
    %1028 = vmatprep.subr.mxu0 0.0
    %1029 = vmatpush1.msra.mxu0 0.0
    %1030 = vmatprep.subr.mxu0 0.0
    %1031 = vmatpush1.msra.mxu0 0.0
    %1032 = vmatprep.subr.mxu0 0.0
    %1033 = vmatpush1.msra.mxu0 0.0
    %1034 = vmatprep.subr.mxu0 0.0
    %1035 = vmatpush1.msra.mxu0 0.0
    %1036 = vmatprep.subr.mxu0 0.0
    %1037 = vmatpush1.msra.mxu0 0.0
    %1038 = vmatprep.subr.mxu0 0.0
    %1039 = vmatpush1.msra.mxu0 0.0
    %1040 = vmatprep.subr.mxu0 0.0
    %1041 = vmatpush1.msra.mxu0 0.0
    %1042 = vmatprep.subr.mxu0 0.0
    %1043 = vmatpush1.msra.mxu0 0.0
    %1044 = vmatprep.subr.mxu0 0.0
    %1045 = vmatpush1.msra.mxu0 0.0
    %1046 = vmatprep.subr.mxu0 0.0
    %1047 = vmatpush1.msra.mxu0 0.0
    %1048 = vmatprep.subr.mxu0 0.0
    %1049 = vmatpush1.msra.mxu0 0.0
    %1050 = vmatprep.subr.mxu0 0.0
    %1051 = vmatpush1.msra.mxu0 0.0
    %1052 = vmatprep.mubr.f32.mxu0 0.0
    %1053 = vmatmul.mubr.f32.gmra.mrb[0].mxu0 %v980
    %v1054 = vpop.f32.mrb[0].mxu0
    %v1055 = vadd.f32 0.0, %v1054
    %v1056 = vpop.f32.mrb[0].mxu0
    %v1057 = vadd.f32 0.0, %v1056
    %1058 = vdwg.mxu0
    %1059 = vmatprep.subr.mxu0 %v37
    %1060 = vmatpush1.msra.mxu0 %v36
    %1061 = vmatprep.subr.mxu0 %v41
    %1062 = vmatpush1.msra.mxu0 %v40
    %1063 = vmatprep.subr.mxu0 %v45
    %1064 = vmatpush1.msra.mxu0 %v44
    %1065 = vmatprep.subr.mxu0 %v49
    %1066 = vmatpush1.msra.mxu0 %v48
    %1067 = vmatprep.subr.mxu0 %v53
    %1068 = vmatpush1.msra.mxu0 %v52
    %1069 = vmatprep.subr.mxu0 %v57
    %1070 = vmatpush1.msra.mxu0 %v56
    %1071 = vmatprep.subr.mxu0 %v61
    %1072 = vmatpush1.msra.mxu0 %v60
    %1073 = vmatprep.subr.mxu0 %v65
    %1074 = vmatpush1.msra.mxu0 %v64
    %1075 = vmatprep.subr.mxu0 %v69
    %1076 = vmatpush1.msra.mxu0 %v68
    %1077 = vmatprep.subr.mxu0 %v73
    %1078 = vmatpush1.msra.mxu0 %v72
    %1079 = vmatprep.subr.mxu0 %v77
    %1080 = vmatpush1.msra.mxu0 %v76
    %1081 = vmatprep.subr.mxu0 %v81
    %1082 = vmatpush1.msra.mxu0 %v80
    %1083 = vmatprep.subr.mxu0 %v85
    %1084 = vmatpush1.msra.mxu0 %v84
    %1085 = vmatprep.subr.mxu0 %v89
    %1086 = vmatpush1.msra.mxu0 %v88
    %1087 = vmatprep.subr.mxu0 %v93
    %1088 = vmatpush1.msra.mxu0 %v92
    %1089 = vmatprep.subr.mxu0 %v97
    %1090 = vmatpush1.msra.mxu0 %v96
    %1091 = vmatprep.subr.mxu0 0.0
    %1092 = vmatpush1.msra.mxu0 0.0
    %1093 = vmatprep.subr.mxu0 0.0
    %1094 = vmatpush1.msra.mxu0 0.0
    %1095 = vmatprep.subr.mxu0 0.0
    %1096 = vmatpush1.msra.mxu0 0.0
    %1097 = vmatprep.subr.mxu0 0.0
    %1098 = vmatpush1.msra.mxu0 0.0
    %1099 = vmatprep.subr.mxu0 0.0
    %1100 = vmatpush1.msra.mxu0 0.0
    %1101 = vmatprep.subr.mxu0 0.0
    %1102 = vmatpush1.msra.mxu0 0.0
    %1103 = vmatprep.subr.mxu0 0.0
    %1104 = vmatpush1.msra.mxu0 0.0
    %1105 = vmatprep.subr.mxu0 0.0
    %1106 = vmatpush1.msra.mxu0 0.0
    %1107 = vmatprep.subr.mxu0 0.0
    %1108 = vmatpush1.msra.mxu0 0.0
    %1109 = vmatprep.subr.mxu0 0.0
    %1110 = vmatpush1.msra.mxu0 0.0
    %1111 = vmatprep.subr.mxu0 0.0
    %1112 = vmatpush1.msra.mxu0 0.0
    %1113 = vmatprep.subr.mxu0 0.0
    %1114 = vmatpush1.msra.mxu0 0.0
    %1115 = vmatprep.subr.mxu0 0.0
    %1116 = vmatpush1.msra.mxu0 0.0
    %1117 = vmatprep.subr.mxu0 0.0
    %1118 = vmatpush1.msra.mxu0 0.0
    %1119 = vmatprep.subr.mxu0 0.0
    %1120 = vmatpush1.msra.mxu0 0.0
    %1121 = vmatprep.subr.mxu0 0.0
    %1122 = vmatpush1.msra.mxu0 0.0
    %1123 = vmatprep.mubr.f32.mxu0 0.0
    %1124 = vmatmul.mubr.f32.gmra.mrb[0].mxu0 %v980
    %v1125 = vpop.f32.mrb[0].mxu0
    %v1126 = vadd.f32 0.0, %v1125
    %v1127 = vpop.f32.mrb[0].mxu0
    %v1128 = vadd.f32 0.0, %v1127
    %1129 = vdwg.mxu0
    %v1130 = vadd.f32 %v984, %v1055
    %v1131 = vadd.f32 %v985, %v1057
    %v1132 = vadd.f32 %v986, %v1126
    %v1133 = vadd.f32 %v987, %v1128
    %v1134 = vxor.u32 %v1130, 2147483648
    %v1135 = vmul.f32 %v1134, 1.442695
    %v1136 = vpow.pop %v1135
    %v1137 = vadd.f32 %v1136, 1.0
    %v1138 = vrcp.pop %v1137
    %v1139 = vmul.f32 1.0, %v1138
    %v1140 = vxor.u32 %v1131, 2147483648
    %v1141 = vmul.f32 %v1140, 1.442695
    %v1142 = vpow.pop %v1141
    %v1143 = vadd.f32 %v1142, 1.0
    %v1144 = vrcp.pop %v1143
    %v1145 = vmul.f32 1.0, %v1144
    %v1146 = vtanh.pop %v1132
    %v1147 = vxor.u32 %v1133, 2147483648
    %v1148 = vmul.f32 %v1147, 1.442695
    %v1149 = vpow.pop %v1148
    %v1150 = vadd.f32 %v1149, 1.0
    %v1151 = vrcp.pop %v1150
    %v1152 = vmul.f32 1.0, %v1151
    %v1153 = vmul.f32 %v1145, %v978
    %v1154 = vmul.f32 %v1139, %v1146
    %v1155 = vadd.f32 %v1153, %v1154
    %v1156 = vtanh.pop %v1155
    %v1157 = vmul.f32 %v1152, %v1156
    %s1158 = scalar_lea.vmem %s2, 40
    %1159 = vst [vmem:[%s1158] sm:$0xff] %v1157
    %s1160 = scalar_lea.vmem %s0, 192
    %v1161 = vld [vmem:[%s1160] sm:$0xff]
    %v1162 = vld [vmem:[%s1160 + $0x8] sm:$0xff]
    %v1163 = vld [vmem:[%s1160 + $0x10] sm:$0xff]
    %v1164 = vld [vmem:[%s1160 + $0x18] sm:$0xff]
    %1165 = vmatprep.subr.mxu0 %v35
    %1166 = vmatpush1.msra.mxu0 %v34
    %1167 = vmatprep.subr.mxu0 %v39
    %1168 = vmatpush1.msra.mxu0 %v38
    %1169 = vmatprep.subr.mxu0 %v43
    %1170 = vmatpush1.msra.mxu0 %v42
    %1171 = vmatprep.subr.mxu0 %v47
    %1172 = vmatpush1.msra.mxu0 %v46
    %1173 = vmatprep.subr.mxu0 %v51
    %1174 = vmatpush1.msra.mxu0 %v50
    %1175 = vmatprep.subr.mxu0 %v55
    %1176 = vmatpush1.msra.mxu0 %v54
    %1177 = vmatprep.subr.mxu0 %v59
    %1178 = vmatpush1.msra.mxu0 %v58
    %1179 = vmatprep.subr.mxu0 %v63
    %1180 = vmatpush1.msra.mxu0 %v62
    %1181 = vmatprep.subr.mxu0 %v67
    %1182 = vmatpush1.msra.mxu0 %v66
    %1183 = vmatprep.subr.mxu0 %v71
    %1184 = vmatpush1.msra.mxu0 %v70
    %1185 = vmatprep.subr.mxu0 %v75
    %1186 = vmatpush1.msra.mxu0 %v74
    %1187 = vmatprep.subr.mxu0 %v79
    %1188 = vmatpush1.msra.mxu0 %v78
    %1189 = vmatprep.subr.mxu0 %v83
    %1190 = vmatpush1.msra.mxu0 %v82
    %1191 = vmatprep.subr.mxu0 %v87
    %1192 = vmatpush1.msra.mxu0 %v86
    %1193 = vmatprep.subr.mxu0 %v91
    %1194 = vmatpush1.msra.mxu0 %v90
    %1195 = vmatprep.subr.mxu0 %v95
    %1196 = vmatpush1.msra.mxu0 %v94
    %1197 = vmatprep.subr.mxu0 0.0
    %1198 = vmatpush1.msra.mxu0 0.0
    %1199 = vmatprep.subr.mxu0 0.0
    %1200 = vmatpush1.msra.mxu0 0.0
    %1201 = vmatprep.subr.mxu0 0.0
    %1202 = vmatpush1.msra.mxu0 0.0
    %1203 = vmatprep.subr.mxu0 0.0
    %1204 = vmatpush1.msra.mxu0 0.0
    %1205 = vmatprep.subr.mxu0 0.0
    %1206 = vmatpush1.msra.mxu0 0.0
    %1207 = vmatprep.subr.mxu0 0.0
    %1208 = vmatpush1.msra.mxu0 0.0
    %1209 = vmatprep.subr.mxu0 0.0
    %1210 = vmatpush1.msra.mxu0 0.0
    %1211 = vmatprep.subr.mxu0 0.0
    %1212 = vmatpush1.msra.mxu0 0.0
    %1213 = vmatprep.subr.mxu0 0.0
    %1214 = vmatpush1.msra.mxu0 0.0
    %1215 = vmatprep.subr.mxu0 0.0
    %1216 = vmatpush1.msra.mxu0 0.0
    %1217 = vmatprep.subr.mxu0 0.0
    %1218 = vmatpush1.msra.mxu0 0.0
    %1219 = vmatprep.subr.mxu0 0.0
    %1220 = vmatpush1.msra.mxu0 0.0
    %1221 = vmatprep.subr.mxu0 0.0
    %1222 = vmatpush1.msra.mxu0 0.0
    %1223 = vmatprep.subr.mxu0 0.0
    %1224 = vmatpush1.msra.mxu0 0.0
    %1225 = vmatprep.subr.mxu0 0.0
    %1226 = vmatpush1.msra.mxu0 0.0
    %1227 = vmatprep.subr.mxu0 0.0
    %1228 = vmatpush1.msra.mxu0 0.0
    %1229 = vmatprep.mubr.f32.mxu0 0.0
    %1230 = vmatmul.mubr.f32.gmra.mrb[0].mxu0 %v1157
    %v1231 = vpop.f32.mrb[0].mxu0
    %v1232 = vadd.f32 0.0, %v1231
    %v1233 = vpop.f32.mrb[0].mxu0
    %v1234 = vadd.f32 0.0, %v1233
    %1235 = vdwg.mxu0
    %1236 = vmatprep.subr.mxu0 %v37
    %1237 = vmatpush1.msra.mxu0 %v36
    %1238 = vmatprep.subr.mxu0 %v41
    %1239 = vmatpush1.msra.mxu0 %v40
    %1240 = vmatprep.subr.mxu0 %v45
    %1241 = vmatpush1.msra.mxu0 %v44
    %1242 = vmatprep.subr.mxu0 %v49
    %1243 = vmatpush1.msra.mxu0 %v48
    %1244 = vmatprep.subr.mxu0 %v53
    %1245 = vmatpush1.msra.mxu0 %v52
    %1246 = vmatprep.subr.mxu0 %v57
    %1247 = vmatpush1.msra.mxu0 %v56
    %1248 = vmatprep.subr.mxu0 %v61
    %1249 = vmatpush1.msra.mxu0 %v60
    %1250 = vmatprep.subr.mxu0 %v65
    %1251 = vmatpush1.msra.mxu0 %v64
    %1252 = vmatprep.subr.mxu0 %v69
    %1253 = vmatpush1.msra.mxu0 %v68
    %1254 = vmatprep.subr.mxu0 %v73
    %1255 = vmatpush1.msra.mxu0 %v72
    %1256 = vmatprep.subr.mxu0 %v77
    %1257 = vmatpush1.msra.mxu0 %v76
    %1258 = vmatprep.subr.mxu0 %v81
    %1259 = vmatpush1.msra.mxu0 %v80
    %1260 = vmatprep.subr.mxu0 %v85
    %1261 = vmatpush1.msra.mxu0 %v84
    %1262 = vmatprep.subr.mxu0 %v89
    %1263 = vmatpush1.msra.mxu0 %v88
    %1264 = vmatprep.subr.mxu0 %v93
    %1265 = vmatpush1.msra.mxu0 %v92
    %1266 = vmatprep.subr.mxu0 %v97
    %1267 = vmatpush1.msra.mxu0 %v96
    %1268 = vmatprep.subr.mxu0 0.0
    %1269 = vmatpush1.msra.mxu0 0.0
    %1270 = vmatprep.subr.mxu0 0.0
    %1271 = vmatpush1.msra.mxu0 0.0
    %1272 = vmatprep.subr.mxu0 0.0
    %1273 = vmatpush1.msra.mxu0 0.0
    %1274 = vmatprep.subr.mxu0 0.0
    %1275 = vmatpush1.msra.mxu0 0.0
    %1276 = vmatprep.subr.mxu0 0.0
    %1277 = vmatpush1.msra.mxu0 0.0
    %1278 = vmatprep.subr.mxu0 0.0
    %1279 = vmatpush1.msra.mxu0 0.0
    %1280 = vmatprep.subr.mxu0 0.0
    %1281 = vmatpush1.msra.mxu0 0.0
    %1282 = vmatprep.subr.mxu0 0.0
    %1283 = vmatpush1.msra.mxu0 0.0
    %1284 = vmatprep.subr.mxu0 0.0
    %1285 = vmatpush1.msra.mxu0 0.0
    %1286 = vmatprep.subr.mxu0 0.0
    %1287 = vmatpush1.msra.mxu0 0.0
    %1288 = vmatprep.subr.mxu0 0.0
    %1289 = vmatpush1.msra.mxu0 0.0
    %1290 = vmatprep.subr.mxu0 0.0
    %1291 = vmatpush1.msra.mxu0 0.0
    %1292 = vmatprep.subr.mxu0 0.0
    %1293 = vmatpush1.msra.mxu0 0.0
    %1294 = vmatprep.subr.mxu0 0.0
    %1295 = vmatpush1.msra.mxu0 0.0
    %1296 = vmatprep.subr.mxu0 0.0
    %1297 = vmatpush1.msra.mxu0 0.0
    %1298 = vmatprep.subr.mxu0 0.0
    %1299 = vmatpush1.msra.mxu0 0.0
    %1300 = vmatprep.mubr.f32.mxu0 0.0
    %1301 = vmatmul.mubr.f32.gmra.mrb[0].mxu0 %v1157
    %v1302 = vpop.f32.mrb[0].mxu0
    %v1303 = vadd.f32 0.0, %v1302
    %v1304 = vpop.f32.mrb[0].mxu0
    %v1305 = vadd.f32 0.0, %v1304
    %1306 = vdwg.mxu0
    %v1307 = vadd.f32 %v1161, %v1232
    %v1308 = vadd.f32 %v1162, %v1234
    %v1309 = vadd.f32 %v1163, %v1303
    %v1310 = vadd.f32 %v1164, %v1305
    %v1311 = vxor.u32 %v1307, 2147483648
    %v1312 = vmul.f32 %v1311, 1.442695
    %v1313 = vpow.pop %v1312
    %v1314 = vadd.f32 %v1313, 1.0
    %v1315 = vrcp.pop %v1314
    %v1316 = vmul.f32 1.0, %v1315
    %v1317 = vxor.u32 %v1308, 2147483648
    %v1318 = vmul.f32 %v1317, 1.442695
    %v1319 = vpow.pop %v1318
    %v1320 = vadd.f32 %v1319, 1.0
    %v1321 = vrcp.pop %v1320
    %v1322 = vmul.f32 1.0, %v1321
    %v1323 = vtanh.pop %v1309
    %v1324 = vxor.u32 %v1310, 2147483648
    %v1325 = vmul.f32 %v1324, 1.442695
    %v1326 = vpow.pop %v1325
    %v1327 = vadd.f32 %v1326, 1.0
    %v1328 = vrcp.pop %v1327
    %v1329 = vmul.f32 1.0, %v1328
    %v1330 = vmul.f32 %v1322, %v1155
    %v1331 = vmul.f32 %v1316, %v1323
    %v1332 = vadd.f32 %v1330, %v1331
    %v1333 = vtanh.pop %v1332
    %v1334 = vmul.f32 %v1329, %v1333
    %s1335 = scalar_lea.vmem %s2, 48
    %1336 = vst [vmem:[%s1335] sm:$0xff] %v1334
    %s1337 = scalar_lea.vmem %s0, 224
    %v1338 = vld [vmem:[%s1337] sm:$0xff]
    %v1339 = vld [vmem:[%s1337 + $0x8] sm:$0xff]
    %v1340 = vld [vmem:[%s1337 + $0x10] sm:$0xff]
    %v1341 = vld [vmem:[%s1337 + $0x18] sm:$0xff]
    %1342 = vmatprep.subr.mxu0 %v35
    %1343 = vmatpush1.msra.mxu0 %v34
    %1344 = vmatprep.subr.mxu0 %v39
    %1345 = vmatpush1.msra.mxu0 %v38
    %1346 = vmatprep.subr.mxu0 %v43
    %1347 = vmatpush1.msra.mxu0 %v42
    %1348 = vmatprep.subr.mxu0 %v47
    %1349 = vmatpush1.msra.mxu0 %v46
    %1350 = vmatprep.subr.mxu0 %v51
    %1351 = vmatpush1.msra.mxu0 %v50
    %1352 = vmatprep.subr.mxu0 %v55
    %1353 = vmatpush1.msra.mxu0 %v54
    %1354 = vmatprep.subr.mxu0 %v59
    %1355 = vmatpush1.msra.mxu0 %v58
    %1356 = vmatprep.subr.mxu0 %v63
    %1357 = vmatpush1.msra.mxu0 %v62
    %1358 = vmatprep.subr.mxu0 %v67
    %1359 = vmatpush1.msra.mxu0 %v66
    %1360 = vmatprep.subr.mxu0 %v71
    %1361 = vmatpush1.msra.mxu0 %v70
    %1362 = vmatprep.subr.mxu0 %v75
    %1363 = vmatpush1.msra.mxu0 %v74
    %1364 = vmatprep.subr.mxu0 %v79
    %1365 = vmatpush1.msra.mxu0 %v78
    %1366 = vmatprep.subr.mxu0 %v83
    %1367 = vmatpush1.msra.mxu0 %v82
    %1368 = vmatprep.subr.mxu0 %v87
    %1369 = vmatpush1.msra.mxu0 %v86
    %1370 = vmatprep.subr.mxu0 %v91
    %1371 = vmatpush1.msra.mxu0 %v90
    %1372 = vmatprep.subr.mxu0 %v95
    %1373 = vmatpush1.msra.mxu0 %v94
    %1374 = vmatprep.subr.mxu0 0.0
    %1375 = vmatpush1.msra.mxu0 0.0
    %1376 = vmatprep.subr.mxu0 0.0
    %1377 = vmatpush1.msra.mxu0 0.0
    %1378 = vmatprep.subr.mxu0 0.0
    %1379 = vmatpush1.msra.mxu0 0.0
    %1380 = vmatprep.subr.mxu0 0.0
    %1381 = vmatpush1.msra.mxu0 0.0
    %1382 = vmatprep.subr.mxu0 0.0
    %1383 = vmatpush1.msra.mxu0 0.0
    %1384 = vmatprep.subr.mxu0 0.0
    %1385 = vmatpush1.msra.mxu0 0.0
    %1386 = vmatprep.subr.mxu0 0.0
    %1387 = vmatpush1.msra.mxu0 0.0
    %1388 = vmatprep.subr.mxu0 0.0
    %1389 = vmatpush1.msra.mxu0 0.0
    %1390 = vmatprep.subr.mxu0 0.0
    %1391 = vmatpush1.msra.mxu0 0.0
    %1392 = vmatprep.subr.mxu0 0.0
    %1393 = vmatpush1.msra.mxu0 0.0
    %1394 = vmatprep.subr.mxu0 0.0
    %1395 = vmatpush1.msra.mxu0 0.0
    %1396 = vmatprep.subr.mxu0 0.0
    %1397 = vmatpush1.msra.mxu0 0.0
    %1398 = vmatprep.subr.mxu0 0.0
    %1399 = vmatpush1.msra.mxu0 0.0
    %1400 = vmatprep.subr.mxu0 0.0
    %1401 = vmatpush1.msra.mxu0 0.0
    %1402 = vmatprep.subr.mxu0 0.0
    %1403 = vmatpush1.msra.mxu0 0.0
    %1404 = vmatprep.subr.mxu0 0.0
    %1405 = vmatpush1.msra.mxu0 0.0
    %1406 = vmatprep.mubr.f32.mxu0 0.0
    %1407 = vmatmul.mubr.f32.gmra.mrb[0].mxu0 %v1334
    %v1408 = vpop.f32.mrb[0].mxu0
    %v1409 = vadd.f32 0.0, %v1408
    %v1410 = vpop.f32.mrb[0].mxu0
    %v1411 = vadd.f32 0.0, %v1410
    %1412 = vdwg.mxu0
    %1413 = vmatprep.subr.mxu0 %v37
    %1414 = vmatpush1.msra.mxu0 %v36
    %1415 = vmatprep.subr.mxu0 %v41
    %1416 = vmatpush1.msra.mxu0 %v40
    %1417 = vmatprep.subr.mxu0 %v45
    %1418 = vmatpush1.msra.mxu0 %v44
    %1419 = vmatprep.subr.mxu0 %v49
    %1420 = vmatpush1.msra.mxu0 %v48
    %1421 = vmatprep.subr.mxu0 %v53
    %1422 = vmatpush1.msra.mxu0 %v52
    %1423 = vmatprep.subr.mxu0 %v57
    %1424 = vmatpush1.msra.mxu0 %v56
    %1425 = vmatprep.subr.mxu0 %v61
    %1426 = vmatpush1.msra.mxu0 %v60
    %1427 = vmatprep.subr.mxu0 %v65
    %1428 = vmatpush1.msra.mxu0 %v64
    %1429 = vmatprep.subr.mxu0 %v69
    %1430 = vmatpush1.msra.mxu0 %v68
    %1431 = vmatprep.subr.mxu0 %v73
    %1432 = vmatpush1.msra.mxu0 %v72
    %1433 = vmatprep.subr.mxu0 %v77
    %1434 = vmatpush1.msra.mxu0 %v76
    %1435 = vmatprep.subr.mxu0 %v81
    %1436 = vmatpush1.msra.mxu0 %v80
    %1437 = vmatprep.subr.mxu0 %v85
    %1438 = vmatpush1.msra.mxu0 %v84
    %1439 = vmatprep.subr.mxu0 %v89
    %1440 = vmatpush1.msra.mxu0 %v88
    %1441 = vmatprep.subr.mxu0 %v93
    %1442 = vmatpush1.msra.mxu0 %v92
    %1443 = vmatprep.subr.mxu0 %v97
    %1444 = vmatpush1.msra.mxu0 %v96
    %1445 = vmatprep.subr.mxu0 0.0
    %1446 = vmatpush1.msra.mxu0 0.0
    %1447 = vmatprep.subr.mxu0 0.0
    %1448 = vmatpush1.msra.mxu0 0.0
    %1449 = vmatprep.subr.mxu0 0.0
    %1450 = vmatpush1.msra.mxu0 0.0
    %1451 = vmatprep.subr.mxu0 0.0
    %1452 = vmatpush1.msra.mxu0 0.0
    %1453 = vmatprep.subr.mxu0 0.0
    %1454 = vmatpush1.msra.mxu0 0.0
    %1455 = vmatprep.subr.mxu0 0.0
    %1456 = vmatpush1.msra.mxu0 0.0
    %1457 = vmatprep.subr.mxu0 0.0
    %1458 = vmatpush1.msra.mxu0 0.0
    %1459 = vmatprep.subr.mxu0 0.0
    %1460 = vmatpush1.msra.mxu0 0.0
    %1461 = vmatprep.subr.mxu0 0.0
    %1462 = vmatpush1.msra.mxu0 0.0
    %1463 = vmatprep.subr.mxu0 0.0
    %1464 = vmatpush1.msra.mxu0 0.0
    %1465 = vmatprep.subr.mxu0 0.0
    %1466 = vmatpush1.msra.mxu0 0.0
    %1467 = vmatprep.subr.mxu0 0.0
    %1468 = vmatpush1.msra.mxu0 0.0
    %1469 = vmatprep.subr.mxu0 0.0
    %1470 = vmatpush1.msra.mxu0 0.0
    %1471 = vmatprep.subr.mxu0 0.0
    %1472 = vmatpush1.msra.mxu0 0.0
    %1473 = vmatprep.subr.mxu0 0.0
    %1474 = vmatpush1.msra.mxu0 0.0
    %1475 = vmatprep.subr.mxu0 0.0
    %1476 = vmatpush1.msra.mxu0 0.0
    %1477 = vmatprep.mubr.f32.mxu0 0.0
    %1478 = vmatmul.mubr.f32.gmra.mrb[0].mxu0 %v1334
    %v1479 = vpop.f32.mrb[0].mxu0
    %v1480 = vadd.f32 0.0, %v1479
    %v1481 = vpop.f32.mrb[0].mxu0
    %v1482 = vadd.f32 0.0, %v1481
    %1483 = vdwg.mxu0
    %v1484 = vadd.f32 %v1338, %v1409
    %v1485 = vadd.f32 %v1339, %v1411
    %v1486 = vadd.f32 %v1340, %v1480
    %v1487 = vadd.f32 %v1341, %v1482
    %v1488 = vxor.u32 %v1484, 2147483648
    %v1489 = vmul.f32 %v1488, 1.442695
    %v1490 = vpow.pop %v1489
    %v1491 = vadd.f32 %v1490, 1.0
    %v1492 = vrcp.pop %v1491
    %v1493 = vmul.f32 1.0, %v1492
    %v1494 = vxor.u32 %v1485, 2147483648
    %v1495 = vmul.f32 %v1494, 1.442695
    %v1496 = vpow.pop %v1495
    %v1497 = vadd.f32 %v1496, 1.0
    %v1498 = vrcp.pop %v1497
    %v1499 = vmul.f32 1.0, %v1498
    %v1500 = vtanh.pop %v1486
    %v1501 = vxor.u32 %v1487, 2147483648
    %v1502 = vmul.f32 %v1501, 1.442695
    %v1503 = vpow.pop %v1502
    %v1504 = vadd.f32 %v1503, 1.0
    %v1505 = vrcp.pop %v1504
    %v1506 = vmul.f32 1.0, %v1505
    %v1507 = vmul.f32 %v1499, %v1332
    %v1508 = vmul.f32 %v1493, %v1500
    %v1509 = vadd.f32 %v1507, %v1508
    %v1510 = vtanh.pop %v1509
    %v1511 = vmul.f32 %v1506, %v1510
    %s1512 = scalar_lea.vmem %s2, 56
    %1513 = vst [vmem:[%s1512] sm:$0xff] %v1511
    %1514 = vst [vmem:[#allocation2] sm:$0xff] %v1511
    %1515 = vst [vmem:[#allocation3] sm:$0xff] %v1509
    // Predicated region
    $region18: #{rnn_forward.1} parent=1 // pred_check
      %p1516 = pneg %p28
    $region19: #{rnn_forward.1} parent=1 // pred_check_branch
      %1518 = sbr.rel (%p1516) target = $region21
    $region20: #{rnn_forward.1} parent=1 // pred_region
      %1519 = vst [vmem:[%s3] sm:$0xff] %v1511
      %1520 = vst [vmem:[%s4] sm:$0xff] %v1509
    $region21: #{rnn_forward.1} parent=1 // pred_fallthru
      _
    // Predicated region
    $region22: #{rnn_forward.1} parent=1 // pred_check
      _
    $region23: #{rnn_forward.1} parent=1 // pred_check_branch
      %1522 = sbr.rel (0) target = $region25
    $region24: #{rnn_forward.1} parent=1 // pred_region
      _
    $region25: #{rnn_forward.1} parent=1 // pred_fallthru
      _
    // Predicated region
    $region26: #{rnn_forward.1} parent=1 // pred_check
      _
    $region27: #{rnn_forward.1} parent=1 // pred_check_branch
      %1524 = sbr.rel (0) target = $region29
    $region28: #{rnn_forward.1} parent=1 // pred_region
      _
    $region29: #{rnn_forward.1} parent=1 // pred_fallthru
      _
    // Predicated region
    $region30: #{rnn_forward.1} parent=1 // pred_check
      _
    $region31: #{rnn_forward.1} parent=1 // pred_check_branch
      %1526 = sbr.rel (0) target = $region33
    $region32: #{rnn_forward.1} parent=1 // pred_region
      _
    $region33: #{rnn_forward.1} parent=1 // pred_fallthru
      _
    // Predicated region
    $region34: #{rnn_forward.1} parent=1 // pred_check
      _
    $region35: #{rnn_forward.1} parent=1 // pred_check_branch
      %1528 = sbr.rel (0) target = $region37
    $region36: #{rnn_forward.1} parent=1 // pred_region
      _
    $region37: #{rnn_forward.1} parent=1 // pred_fallthru
      _
    // Predicated region
    $region38: #{rnn_forward.1} parent=1 // pred_check
      _
    $region39: #{rnn_forward.1} parent=1 // pred_check_branch
      %1530 = sbr.rel (0) target = $region41
    $region40: #{rnn_forward.1} parent=1 // pred_region
      _
    $region41: #{rnn_forward.1} parent=1 // pred_fallthru
      _
    // Predicated region
    $region42: #{rnn_forward.1} parent=1 // pred_check
      _
    $region43: #{rnn_forward.1} parent=1 // pred_check_branch
      %1532 = sbr.rel (0) target = $region45
    $region44: #{rnn_forward.1} parent=1 // pred_region
      _
    $region45: #{rnn_forward.1} parent=1 // pred_fallthru
      _
    %1533 = vsyncpa [#allocation5], 1

</llo_original>
